<compile_context>
chip_gen: v6e
topology: v6e:2x2x1
jax: 0.10.0
libtpu: 0.0.40
codegen_flags: <defaults>
</compile_context>

<pallas_src>
import functools

import jax
import jax.numpy as jnp
from jax.experimental import pallas as pl
from jax.experimental.pallas import tpu as pltpu

N_FEATURE = 16
N_HIDDEN = 32
N_OUTPUT = 8


def _round_up(n, m):
    return -(-n // m) * m


def _native_bf16_vpu():
    """True on chips with a bf16-capable VPU/EUP (v6e / v7x); False otherwise."""
    try:
        kind = jax.devices()[0].device_kind.lower()
    except Exception:
        return False
    if any(v in kind for v in ("v2", "v3", "v4", "v5")):
        return False
    return ("v6" in kind) or ("v7" in kind)


def _attention_stream(xv, qk, v0, cdtype):
    """Row-streaming self-attention in the transposed (feature, batch) layout.

    xv: (D, Bt) f32; qk = q*k and v0 are scalars.  Returns (D, Bt) f32.
    Math: alpha[i, j, b] = qk * x_i * x_j ; softmax over j ;
          O[j, b] = v0 * sum_i x_i * alphaD[i, j, b].
    Only one (D, Bt) row of alpha is ever live (no (D, D, Bt) temporaries).
    Elementwise chain runs in `cdtype` (bf16 on v6e/v7x -> packed VPU/EUP);
    denominators and the output accumulator stay f32.
    """
    D = xv.shape[0]
    xc = xv.astype(cdtype)                            # bound once, reused every row
    o = jnp.zeros(xv.shape, jnp.float32)              # f32 accumulator
    for i in range(D):                                # D in {8, 16}: fully unrolled
        xi = xv[i : i + 1, :]                         # (1, Bt) f32, static sublane slice
        row = (qk * xi).astype(cdtype) * xc           # alpha row i over j   (packed mul)
        m = jnp.max(row, axis=0, keepdims=True)       # row max over j       (sublanes/XLU)
        e32 = jnp.exp(row - m).astype(jnp.float32)    # EUP exp (packed in bf16 mode)
        denom = jnp.sum(e32, axis=0, keepdims=True)   # f32 denominator      (sublanes/XLU)
        scale = xi * pl.reciprocal(denom, approx=True)        # (1, Bt), EUP slot
        o = o + scale * e32                           # f32 accumulate: o[j] += x_i*alphaD[i,j]
    return v0 * o


def _kernel(scal_ref, x_ref, wh_ref, bh_ref, wo_ref, bo_ref, out_ref, *, cdtype):
    x = x_ref[...]                                    # (16, Bt) f32
    qk1, v1, qk2, v2 = scal_ref[0], scal_ref[1], scal_ref[2], scal_ref[3]

    # Attention block 1 on all 16 features (row-streamed, no (16,16,Bt) temp).
    o1 = _attention_stream(x, qk1, v1, cdtype)        # (16, Bt) f32

    # Linear(16 -> H) + sigmoid.  Single-pass bf16 MXU operands on v6e/v7x,
    # f32 accumulation; output stays lane-dense over the batch.
    h = jnp.dot(wh_ref[...].astype(cdtype), o1.astype(cdtype),
                preferred_element_type=jnp.float32) + bh_ref[...]
    x1 = jax.nn.sigmoid(h.astype(cdtype))             # EUP (packed in bf16 mode)

    # Linear(H -> 8).
    x2 = jnp.dot(wo_ref[...].astype(cdtype), x1.astype(cdtype),
                 preferred_element_type=jnp.float32) + bo_ref[...]

    # Attention block 2 (D = 8), row-streamed.
    o2 = _attention_stream(x2, qk2, v2, cdtype)       # (8, Bt) f32

    # Final softmax over the 8 features: exact divide (feeds output), f32.
    m = jnp.max(o2, axis=0, keepdims=True)
    e = jnp.exp(o2 - m)
    w = e / jnp.sum(e, axis=0, keepdims=True)

    # out[b] = sum_j x[8+j, b] * w[j, b]  -> lane-dense (1, Bt) store.
    out_ref[...] = jnp.sum(x[8:16, :] * w, axis=0, keepdims=True)


def self_attention_ann16(x, wq, wk, wv, w_hidden, b_hidden, w_output, b_output,
                         *, block_b=2048, use_bf16=None):
    """x: (B, 16).  Returns (B, 1, 1), matching the PyTorch module.

    block_b:  maximum batch tile (lane axis), rounded to a multiple of 128.
              With the streaming rewrite per-tile VMEM is only ~100s of KiB,
              so VMEM capacity is not the limiter on any TPU generation; this
              mostly bounds vreg/spill pressure.
    use_bf16: run the attention/exp/sigmoid chain in bf16 (v6e/v7x); None = auto.
    """
    x = jnp.asarray(x, jnp.float32)
    B = x.shape[0]
    assert x.shape[1] == N_FEATURE

    if use_bf16 is None:
        use_bf16 = _native_bf16_vpu()
    cdtype = jnp.bfloat16 if use_bf16 else jnp.float32

    # Adaptive batch tiling: round B up to a lane multiple, cap the tile, and
    # guarantee >= 2 grid tiles when possible so both TensorCores get work
    # under the "parallel" grid axis (v7x megacore).
    B128 = _round_up(B, 128)
    bt = min(_round_up(int(block_b), 128), B128)
    if B128 // bt < 2 and B128 >= 256:
        bt = _round_up(-(-B128 // 2), 128)
    num_tiles = -(-B128 // bt)
    Bp = num_tiles * bt

    # Transpose so batch sits on the lane axis; zero-pad to a tile multiple
    # (padded columns are numerically benign and sliced off before return).
    xT = jnp.pad(x.T, ((0, 0), (0, Bp - B)))                     # (16, Bp)

    # Folded scalar weights [q0*k0, v0, q1*k1, v1] -> SMEM.
    scal = jnp.stack([wq[0] * wk[0], wv[0],
                      wq[1] * wk[1], wv[1]]).astype(jnp.float32)  # (4,)

    # PyTorch Linear weights are (out, in): exactly what W @ x_T needs.
    wh = jnp.asarray(w_hidden, jnp.float32)                      # (H, 16)
    bh = jnp.asarray(b_hidden, jnp.float32).reshape(-1, 1)       # (H, 1)
    wo = jnp.asarray(w_output, jnp.float32)                      # (8, H)
    bo = jnp.asarray(b_output, jnp.float32).reshape(-1, 1)       # (8, 1)

    out = pl.pallas_call(
        functools.partial(_kernel, cdtype=cdtype),
        out_shape=jax.ShapeDtypeStruct((1, Bp), jnp.float32),
        grid=(num_tiles,),
        in_specs=[
            pl.BlockSpec(memory_space=pltpu.MemorySpace.SMEM),   # folded scalars
            pl.BlockSpec((N_FEATURE, bt), lambda i: (0, i)),     # x^T batch tile
            pl.BlockSpec(memory_space=pltpu.MemorySpace.VMEM),   # W_hidden
            pl.BlockSpec(memory_space=pltpu.MemorySpace.VMEM),   # b_hidden
            pl.BlockSpec(memory_space=pltpu.MemorySpace.VMEM),   # W_output
            pl.BlockSpec(memory_space=pltpu.MemorySpace.VMEM),   # b_output
        ],
        out_specs=pl.BlockSpec((1, bt), lambda i: (0, i)),       # lane-dense out
        compiler_params=pltpu.CompilerParams(
            dimension_semantics=("parallel",),
            vmem_limit_bytes=32 * 1024 * 1024,
        ),
    )(scal, xT, wh, bh, wo, bo)

    return out[0, :B].reshape(B, 1, 1)


def _reference(x, wq, wk, wv, w_hidden, b_hidden, w_output, b_output):
    """Pure-JAX mirror of the PyTorch forward (for validation)."""
    x3 = x[:, None, :]                                           # (B, 1, 16)

    def attn(xv, q0, k0, v0):
        Q, K, V = q0 * xv, k0 * xv, v0 * xv                      # (B, 1, D)
        alpha = jnp.swapaxes(K, 1, 2) @ Q                        # (B, D, D)
        alpha_d = jax.nn.softmax(alpha, axis=2)
        return V @ alpha_d                                       # (B, 1, D)

    o1 = attn(x3[:, :, 0:16], wq[0], wk[0], wv[0])
    x1 = jax.nn.sigmoid(o1 @ w_hidden.T + b_hidden)
    x2 = x1 @ w_output.T + b_output
    o2 = attn(x2, wq[1], wk[1], wv[1])
    o = o2[:, 0, :]
    w = jax.nn.softmax(o, axis=1)
    xt = x3[:, :, 8:16]
    return xt @ w[:, :, None]                                    # (B, 1, 1)


if __name__ == "__main__":
    key = jax.random.PRNGKey(0)
    kx, kq, kk, kv, kwh, kbh, kwo, kbo = jax.random.split(key, 8)

    # Small demo; B is deliberately NOT a multiple of 128 so the padding path
    # and the >= 2-tile adaptive grid (2 tiles of 256) are exercised.
    B = 300
    x = jax.random.normal(kx, (B, N_FEATURE), jnp.float32)
    # wq/wk/wv: one scalar per attention block (indexed [0] and [1] in forward)
    wq = jax.random.normal(kq, (2,), jnp.float32)
    wk = jax.random.normal(kk, (2,), jnp.float32)
    wv = jax.random.normal(kv, (2,), jnp.float32)
    # nn.Linear weights in PyTorch layout (out_features, in_features)
    w_hidden = 0.1 * jax.random.normal(kwh, (N_HIDDEN, N_FEATURE), jnp.float32)
    b_hidden = 0.1 * jax.random.normal(kbh, (N_HIDDEN,), jnp.float32)
    w_output = 0.1 * jax.random.normal(kwo, (N_OUTPUT, N_HIDDEN), jnp.float32)
    b_output = 0.1 * jax.random.normal(kbo, (N_OUTPUT,), jnp.float32)

    use_bf16 = _native_bf16_vpu()
    out = self_attention_ann16(x, wq, wk, wv, w_hidden, b_hidden,
                               w_output, b_output, use_bf16=use_bf16)
    out = jax.block_until_ready(out)

    ref = _reference(x, wq, wk, wv, w_hidden, b_hidden, w_output, b_output)
    assert out.shape == (B, 1, 1)
    # f32 path (v5e and unknown chips): only the EUP approx reciprocals in the
    # two attention softmaxes contribute (final softmax divide is exact).
    # bf16 path (v6e/v7x): additionally carries bf16 rounding through the
    # attention/exp/sigmoid chain (f32 denominators/accumulators throughout).
    tol = 5e-2 if use_bf16 else 1e-2
    assert jnp.allclose(out, ref, atol=tol, rtol=tol), \
        f"max abs err {jnp.max(jnp.abs(out - ref))}"
    print("KERNEL_OK")
</pallas_src>

<mosaic_0001>
module attributes {stable_mosaic.version = 11 : i64} {
  func.func @_kernel(%arg0: i32, %arg1: memref<4xf32, #tpu.memory_space<smem>>, %arg2: memref<16x256xf32, #tpu.memory_space<vmem>>, %arg3: memref<32x16xf32, #tpu.memory_space<vmem>>, %arg4: memref<32x1xf32, #tpu.memory_space<vmem>>, %arg5: memref<8x32xf32, #tpu.memory_space<vmem>>, %arg6: memref<8x1xf32, #tpu.memory_space<vmem>>, %arg7: memref<1x256xf32, #tpu.memory_space<vmem>>) attributes {dimension_semantics = [#tpu.dimension_semantics<parallel>], iteration_bounds = array<i64: 2>, scalar_prefetch = 0 : i64, scratch_operands = 0 : i64, tpu.core_type = #tpu.core_type<tc>, window_params = [{transform_indices = @transform_0, window_bounds = array<i64: 4>}, {transform_indices = @transform_1, window_bounds = array<i64: 16, 256>}, {pipeline_mode = #tpu.pipeline_mode<synchronous>, transform_indices = @transform_2, window_bounds = array<i64: 32, 16>}, {pipeline_mode = #tpu.pipeline_mode<synchronous>, transform_indices = @transform_3, window_bounds = array<i64: 32, 1>}, {pipeline_mode = #tpu.pipeline_mode<synchronous>, transform_indices = @transform_4, window_bounds = array<i64: 8, 32>}, {pipeline_mode = #tpu.pipeline_mode<synchronous>, transform_indices = @transform_5, window_bounds = array<i64: 8, 1>}, {transform_indices = @transform_6, window_bounds = array<i64: 1, 256>}]} {
    %c0 = arith.constant 0 : index
    %c0_0 = arith.constant 0 : index
    %0 = vector.load %arg2[%c0, %c0_0] : memref<16x256xf32, #tpu.memory_space<vmem>>, vector<16x256xf32>
    %c0_1 = arith.constant 0 : index
    %1 = memref.load %arg1[%c0_1] : memref<4xf32, #tpu.memory_space<smem>>
    %c1 = arith.constant 1 : index
    %2 = memref.load %arg1[%c1] : memref<4xf32, #tpu.memory_space<smem>>
    %c2 = arith.constant 2 : index
    %3 = memref.load %arg1[%c2] : memref<4xf32, #tpu.memory_space<smem>>
    %c3 = arith.constant 3 : index
    %4 = memref.load %arg1[%c3] : memref<4xf32, #tpu.memory_space<smem>>
    %cst = arith.constant 0.000000e+00 : f32
    %5 = vector.broadcast %cst : f32 to vector<16x256xf32>
    %6 = vector.extract_strided_slice %0 {offsets = [0, 0], sizes = [1, 256], strides = [1, 1]} : vector<16x256xf32> to vector<1x256xf32>
    %7 = vector.broadcast %1 : f32 to vector<1x256xf32>
    %8 = arith.mulf %7, %6 : vector<1x256xf32>
    %9 = vector.broadcast %8 : vector<1x256xf32> to vector<16x256xf32>
    %10 = arith.mulf %9, %0 : vector<16x256xf32>
    %cst_2 = arith.constant dense<0xFF800000> : vector<256xf32>
    %11 = vector.multi_reduction <maximumf>, %10, %cst_2 [0] : vector<16x256xf32> to vector<256xf32>
    %12 = vector.shape_cast %11 : vector<256xf32> to vector<1x256xf32>
    %13 = vector.broadcast %12 : vector<1x256xf32> to vector<16x256xf32>
    %14 = arith.subf %10, %13 : vector<16x256xf32>
    %15 = math.exp %14 : vector<16x256xf32>
    %cst_3 = arith.constant dense<0.000000e+00> : vector<256xf32>
    %16 = vector.multi_reduction <add>, %15, %cst_3 [0] : vector<16x256xf32> to vector<256xf32>
    %17 = vector.shape_cast %16 : vector<256xf32> to vector<1x256xf32>
    %18 = tpu.reciprocal %17 {approx = true} : vector<1x256xf32> -> vector<1x256xf32>
    %19 = arith.mulf %6, %18 : vector<1x256xf32>
    %20 = vector.broadcast %19 : vector<1x256xf32> to vector<16x256xf32>
    %21 = arith.mulf %20, %15 : vector<16x256xf32>
    %22 = arith.addf %5, %21 : vector<16x256xf32>
    %23 = vector.extract_strided_slice %0 {offsets = [1, 0], sizes = [1, 256], strides = [1, 1]} : vector<16x256xf32> to vector<1x256xf32>
    %24 = vector.broadcast %1 : f32 to vector<1x256xf32>
    %25 = arith.mulf %24, %23 : vector<1x256xf32>
    %26 = vector.broadcast %25 : vector<1x256xf32> to vector<16x256xf32>
    %27 = arith.mulf %26, %0 : vector<16x256xf32>
    %cst_4 = arith.constant dense<0xFF800000> : vector<256xf32>
    %28 = vector.multi_reduction <maximumf>, %27, %cst_4 [0] : vector<16x256xf32> to vector<256xf32>
    %29 = vector.shape_cast %28 : vector<256xf32> to vector<1x256xf32>
    %30 = vector.broadcast %29 : vector<1x256xf32> to vector<16x256xf32>
    %31 = arith.subf %27, %30 : vector<16x256xf32>
    %32 = math.exp %31 : vector<16x256xf32>
    %cst_5 = arith.constant dense<0.000000e+00> : vector<256xf32>
    %33 = vector.multi_reduction <add>, %32, %cst_5 [0] : vector<16x256xf32> to vector<256xf32>
    %34 = vector.shape_cast %33 : vector<256xf32> to vector<1x256xf32>
    %35 = tpu.reciprocal %34 {approx = true} : vector<1x256xf32> -> vector<1x256xf32>
    %36 = arith.mulf %23, %35 : vector<1x256xf32>
    %37 = vector.broadcast %36 : vector<1x256xf32> to vector<16x256xf32>
    %38 = arith.mulf %37, %32 : vector<16x256xf32>
    %39 = arith.addf %22, %38 : vector<16x256xf32>
    %40 = vector.extract_strided_slice %0 {offsets = [2, 0], sizes = [1, 256], strides = [1, 1]} : vector<16x256xf32> to vector<1x256xf32>
    %41 = vector.broadcast %1 : f32 to vector<1x256xf32>
    %42 = arith.mulf %41, %40 : vector<1x256xf32>
    %43 = vector.broadcast %42 : vector<1x256xf32> to vector<16x256xf32>
    %44 = arith.mulf %43, %0 : vector<16x256xf32>
    %cst_6 = arith.constant dense<0xFF800000> : vector<256xf32>
    %45 = vector.multi_reduction <maximumf>, %44, %cst_6 [0] : vector<16x256xf32> to vector<256xf32>
    %46 = vector.shape_cast %45 : vector<256xf32> to vector<1x256xf32>
    %47 = vector.broadcast %46 : vector<1x256xf32> to vector<16x256xf32>
    %48 = arith.subf %44, %47 : vector<16x256xf32>
    %49 = math.exp %48 : vector<16x256xf32>
    %cst_7 = arith.constant dense<0.000000e+00> : vector<256xf32>
    %50 = vector.multi_reduction <add>, %49, %cst_7 [0] : vector<16x256xf32> to vector<256xf32>
    %51 = vector.shape_cast %50 : vector<256xf32> to vector<1x256xf32>
    %52 = tpu.reciprocal %51 {approx = true} : vector<1x256xf32> -> vector<1x256xf32>
    %53 = arith.mulf %40, %52 : vector<1x256xf32>
    %54 = vector.broadcast %53 : vector<1x256xf32> to vector<16x256xf32>
    %55 = arith.mulf %54, %49 : vector<16x256xf32>
    %56 = arith.addf %39, %55 : vector<16x256xf32>
    %57 = vector.extract_strided_slice %0 {offsets = [3, 0], sizes = [1, 256], strides = [1, 1]} : vector<16x256xf32> to vector<1x256xf32>
    %58 = vector.broadcast %1 : f32 to vector<1x256xf32>
    %59 = arith.mulf %58, %57 : vector<1x256xf32>
    %60 = vector.broadcast %59 : vector<1x256xf32> to vector<16x256xf32>
    %61 = arith.mulf %60, %0 : vector<16x256xf32>
    %cst_8 = arith.constant dense<0xFF800000> : vector<256xf32>
    %62 = vector.multi_reduction <maximumf>, %61, %cst_8 [0] : vector<16x256xf32> to vector<256xf32>
    %63 = vector.shape_cast %62 : vector<256xf32> to vector<1x256xf32>
    %64 = vector.broadcast %63 : vector<1x256xf32> to vector<16x256xf32>
    %65 = arith.subf %61, %64 : vector<16x256xf32>
    %66 = math.exp %65 : vector<16x256xf32>
    %cst_9 = arith.constant dense<0.000000e+00> : vector<256xf32>
    %67 = vector.multi_reduction <add>, %66, %cst_9 [0] : vector<16x256xf32> to vector<256xf32>
    %68 = vector.shape_cast %67 : vector<256xf32> to vector<1x256xf32>
    %69 = tpu.reciprocal %68 {approx = true} : vector<1x256xf32> -> vector<1x256xf32>
    %70 = arith.mulf %57, %69 : vector<1x256xf32>
    %71 = vector.broadcast %70 : vector<1x256xf32> to vector<16x256xf32>
    %72 = arith.mulf %71, %66 : vector<16x256xf32>
    %73 = arith.addf %56, %72 : vector<16x256xf32>
    %74 = vector.extract_strided_slice %0 {offsets = [4, 0], sizes = [1, 256], strides = [1, 1]} : vector<16x256xf32> to vector<1x256xf32>
    %75 = vector.broadcast %1 : f32 to vector<1x256xf32>
    %76 = arith.mulf %75, %74 : vector<1x256xf32>
    %77 = vector.broadcast %76 : vector<1x256xf32> to vector<16x256xf32>
    %78 = arith.mulf %77, %0 : vector<16x256xf32>
    %cst_10 = arith.constant dense<0xFF800000> : vector<256xf32>
    %79 = vector.multi_reduction <maximumf>, %78, %cst_10 [0] : vector<16x256xf32> to vector<256xf32>
    %80 = vector.shape_cast %79 : vector<256xf32> to vector<1x256xf32>
    %81 = vector.broadcast %80 : vector<1x256xf32> to vector<16x256xf32>
    %82 = arith.subf %78, %81 : vector<16x256xf32>
    %83 = math.exp %82 : vector<16x256xf32>
    %cst_11 = arith.constant dense<0.000000e+00> : vector<256xf32>
    %84 = vector.multi_reduction <add>, %83, %cst_11 [0] : vector<16x256xf32> to vector<256xf32>
    %85 = vector.shape_cast %84 : vector<256xf32> to vector<1x256xf32>
    %86 = tpu.reciprocal %85 {approx = true} : vector<1x256xf32> -> vector<1x256xf32>
    %87 = arith.mulf %74, %86 : vector<1x256xf32>
    %88 = vector.broadcast %87 : vector<1x256xf32> to vector<16x256xf32>
    %89 = arith.mulf %88, %83 : vector<16x256xf32>
    %90 = arith.addf %73, %89 : vector<16x256xf32>
    %91 = vector.extract_strided_slice %0 {offsets = [5, 0], sizes = [1, 256], strides = [1, 1]} : vector<16x256xf32> to vector<1x256xf32>
    %92 = vector.broadcast %1 : f32 to vector<1x256xf32>
    %93 = arith.mulf %92, %91 : vector<1x256xf32>
    %94 = vector.broadcast %93 : vector<1x256xf32> to vector<16x256xf32>
    %95 = arith.mulf %94, %0 : vector<16x256xf32>
    %cst_12 = arith.constant dense<0xFF800000> : vector<256xf32>
    %96 = vector.multi_reduction <maximumf>, %95, %cst_12 [0] : vector<16x256xf32> to vector<256xf32>
    %97 = vector.shape_cast %96 : vector<256xf32> to vector<1x256xf32>
    %98 = vector.broadcast %97 : vector<1x256xf32> to vector<16x256xf32>
    %99 = arith.subf %95, %98 : vector<16x256xf32>
    %100 = math.exp %99 : vector<16x256xf32>
    %cst_13 = arith.constant dense<0.000000e+00> : vector<256xf32>
    %101 = vector.multi_reduction <add>, %100, %cst_13 [0] : vector<16x256xf32> to vector<256xf32>
    %102 = vector.shape_cast %101 : vector<256xf32> to vector<1x256xf32>
    %103 = tpu.reciprocal %102 {approx = true} : vector<1x256xf32> -> vector<1x256xf32>
    %104 = arith.mulf %91, %103 : vector<1x256xf32>
    %105 = vector.broadcast %104 : vector<1x256xf32> to vector<16x256xf32>
    %106 = arith.mulf %105, %100 : vector<16x256xf32>
    %107 = arith.addf %90, %106 : vector<16x256xf32>
    %108 = vector.extract_strided_slice %0 {offsets = [6, 0], sizes = [1, 256], strides = [1, 1]} : vector<16x256xf32> to vector<1x256xf32>
    %109 = vector.broadcast %1 : f32 to vector<1x256xf32>
    %110 = arith.mulf %109, %108 : vector<1x256xf32>
    %111 = vector.broadcast %110 : vector<1x256xf32> to vector<16x256xf32>
    %112 = arith.mulf %111, %0 : vector<16x256xf32>
    %cst_14 = arith.constant dense<0xFF800000> : vector<256xf32>
    %113 = vector.multi_reduction <maximumf>, %112, %cst_14 [0] : vector<16x256xf32> to vector<256xf32>
    %114 = vector.shape_cast %113 : vector<256xf32> to vector<1x256xf32>
    %115 = vector.broadcast %114 : vector<1x256xf32> to vector<16x256xf32>
    %116 = arith.subf %112, %115 : vector<16x256xf32>
    %117 = math.exp %116 : vector<16x256xf32>
    %cst_15 = arith.constant dense<0.000000e+00> : vector<256xf32>
    %118 = vector.multi_reduction <add>, %117, %cst_15 [0] : vector<16x256xf32> to vector<256xf32>
    %119 = vector.shape_cast %118 : vector<256xf32> to vector<1x256xf32>
    %120 = tpu.reciprocal %119 {approx = true} : vector<1x256xf32> -> vector<1x256xf32>
    %121 = arith.mulf %108, %120 : vector<1x256xf32>
    %122 = vector.broadcast %121 : vector<1x256xf32> to vector<16x256xf32>
    %123 = arith.mulf %122, %117 : vector<16x256xf32>
    %124 = arith.addf %107, %123 : vector<16x256xf32>
    %125 = vector.extract_strided_slice %0 {offsets = [7, 0], sizes = [1, 256], strides = [1, 1]} : vector<16x256xf32> to vector<1x256xf32>
    %126 = vector.broadcast %1 : f32 to vector<1x256xf32>
    %127 = arith.mulf %126, %125 : vector<1x256xf32>
    %128 = vector.broadcast %127 : vector<1x256xf32> to vector<16x256xf32>
    %129 = arith.mulf %128, %0 : vector<16x256xf32>
    %cst_16 = arith.constant dense<0xFF800000> : vector<256xf32>
    %130 = vector.multi_reduction <maximumf>, %129, %cst_16 [0] : vector<16x256xf32> to vector<256xf32>
    %131 = vector.shape_cast %130 : vector<256xf32> to vector<1x256xf32>
    %132 = vector.broadcast %131 : vector<1x256xf32> to vector<16x256xf32>
    %133 = arith.subf %129, %132 : vector<16x256xf32>
    %134 = math.exp %133 : vector<16x256xf32>
    %cst_17 = arith.constant dense<0.000000e+00> : vector<256xf32>
    %135 = vector.multi_reduction <add>, %134, %cst_17 [0] : vector<16x256xf32> to vector<256xf32>
    %136 = vector.shape_cast %135 : vector<256xf32> to vector<1x256xf32>
    %137 = tpu.reciprocal %136 {approx = true} : vector<1x256xf32> -> vector<1x256xf32>
    %138 = arith.mulf %125, %137 : vector<1x256xf32>
    %139 = vector.broadcast %138 : vector<1x256xf32> to vector<16x256xf32>
    %140 = arith.mulf %139, %134 : vector<16x256xf32>
    %141 = arith.addf %124, %140 : vector<16x256xf32>
    %142 = vector.extract_strided_slice %0 {offsets = [8, 0], sizes = [1, 256], strides = [1, 1]} : vector<16x256xf32> to vector<1x256xf32>
    %143 = vector.broadcast %1 : f32 to vector<1x256xf32>
    %144 = arith.mulf %143, %142 : vector<1x256xf32>
    %145 = vector.broadcast %144 : vector<1x256xf32> to vector<16x256xf32>
    %146 = arith.mulf %145, %0 : vector<16x256xf32>
    %cst_18 = arith.constant dense<0xFF800000> : vector<256xf32>
    %147 = vector.multi_reduction <maximumf>, %146, %cst_18 [0] : vector<16x256xf32> to vector<256xf32>
    %148 = vector.shape_cast %147 : vector<256xf32> to vector<1x256xf32>
    %149 = vector.broadcast %148 : vector<1x256xf32> to vector<16x256xf32>
    %150 = arith.subf %146, %149 : vector<16x256xf32>
    %151 = math.exp %150 : vector<16x256xf32>
    %cst_19 = arith.constant dense<0.000000e+00> : vector<256xf32>
    %152 = vector.multi_reduction <add>, %151, %cst_19 [0] : vector<16x256xf32> to vector<256xf32>
    %153 = vector.shape_cast %152 : vector<256xf32> to vector<1x256xf32>
    %154 = tpu.reciprocal %153 {approx = true} : vector<1x256xf32> -> vector<1x256xf32>
    %155 = arith.mulf %142, %154 : vector<1x256xf32>
    %156 = vector.broadcast %155 : vector<1x256xf32> to vector<16x256xf32>
    %157 = arith.mulf %156, %151 : vector<16x256xf32>
    %158 = arith.addf %141, %157 : vector<16x256xf32>
    %159 = vector.extract_strided_slice %0 {offsets = [9, 0], sizes = [1, 256], strides = [1, 1]} : vector<16x256xf32> to vector<1x256xf32>
    %160 = vector.broadcast %1 : f32 to vector<1x256xf32>
    %161 = arith.mulf %160, %159 : vector<1x256xf32>
    %162 = vector.broadcast %161 : vector<1x256xf32> to vector<16x256xf32>
    %163 = arith.mulf %162, %0 : vector<16x256xf32>
    %cst_20 = arith.constant dense<0xFF800000> : vector<256xf32>
    %164 = vector.multi_reduction <maximumf>, %163, %cst_20 [0] : vector<16x256xf32> to vector<256xf32>
    %165 = vector.shape_cast %164 : vector<256xf32> to vector<1x256xf32>
    %166 = vector.broadcast %165 : vector<1x256xf32> to vector<16x256xf32>
    %167 = arith.subf %163, %166 : vector<16x256xf32>
    %168 = math.exp %167 : vector<16x256xf32>
    %cst_21 = arith.constant dense<0.000000e+00> : vector<256xf32>
    %169 = vector.multi_reduction <add>, %168, %cst_21 [0] : vector<16x256xf32> to vector<256xf32>
    %170 = vector.shape_cast %169 : vector<256xf32> to vector<1x256xf32>
    %171 = tpu.reciprocal %170 {approx = true} : vector<1x256xf32> -> vector<1x256xf32>
    %172 = arith.mulf %159, %171 : vector<1x256xf32>
    %173 = vector.broadcast %172 : vector<1x256xf32> to vector<16x256xf32>
    %174 = arith.mulf %173, %168 : vector<16x256xf32>
    %175 = arith.addf %158, %174 : vector<16x256xf32>
    %176 = vector.extract_strided_slice %0 {offsets = [10, 0], sizes = [1, 256], strides = [1, 1]} : vector<16x256xf32> to vector<1x256xf32>
    %177 = vector.broadcast %1 : f32 to vector<1x256xf32>
    %178 = arith.mulf %177, %176 : vector<1x256xf32>
    %179 = vector.broadcast %178 : vector<1x256xf32> to vector<16x256xf32>
    %180 = arith.mulf %179, %0 : vector<16x256xf32>
    %cst_22 = arith.constant dense<0xFF800000> : vector<256xf32>
    %181 = vector.multi_reduction <maximumf>, %180, %cst_22 [0] : vector<16x256xf32> to vector<256xf32>
    %182 = vector.shape_cast %181 : vector<256xf32> to vector<1x256xf32>
    %183 = vector.broadcast %182 : vector<1x256xf32> to vector<16x256xf32>
    %184 = arith.subf %180, %183 : vector<16x256xf32>
    %185 = math.exp %184 : vector<16x256xf32>
    %cst_23 = arith.constant dense<0.000000e+00> : vector<256xf32>
    %186 = vector.multi_reduction <add>, %185, %cst_23 [0] : vector<16x256xf32> to vector<256xf32>
    %187 = vector.shape_cast %186 : vector<256xf32> to vector<1x256xf32>
    %188 = tpu.reciprocal %187 {approx = true} : vector<1x256xf32> -> vector<1x256xf32>
    %189 = arith.mulf %176, %188 : vector<1x256xf32>
    %190 = vector.broadcast %189 : vector<1x256xf32> to vector<16x256xf32>
    %191 = arith.mulf %190, %185 : vector<16x256xf32>
    %192 = arith.addf %175, %191 : vector<16x256xf32>
    %193 = vector.extract_strided_slice %0 {offsets = [11, 0], sizes = [1, 256], strides = [1, 1]} : vector<16x256xf32> to vector<1x256xf32>
    %194 = vector.broadcast %1 : f32 to vector<1x256xf32>
    %195 = arith.mulf %194, %193 : vector<1x256xf32>
    %196 = vector.broadcast %195 : vector<1x256xf32> to vector<16x256xf32>
    %197 = arith.mulf %196, %0 : vector<16x256xf32>
    %cst_24 = arith.constant dense<0xFF800000> : vector<256xf32>
    %198 = vector.multi_reduction <maximumf>, %197, %cst_24 [0] : vector<16x256xf32> to vector<256xf32>
    %199 = vector.shape_cast %198 : vector<256xf32> to vector<1x256xf32>
    %200 = vector.broadcast %199 : vector<1x256xf32> to vector<16x256xf32>
    %201 = arith.subf %197, %200 : vector<16x256xf32>
    %202 = math.exp %201 : vector<16x256xf32>
    %cst_25 = arith.constant dense<0.000000e+00> : vector<256xf32>
    %203 = vector.multi_reduction <add>, %202, %cst_25 [0] : vector<16x256xf32> to vector<256xf32>
    %204 = vector.shape_cast %203 : vector<256xf32> to vector<1x256xf32>
    %205 = tpu.reciprocal %204 {approx = true} : vector<1x256xf32> -> vector<1x256xf32>
    %206 = arith.mulf %193, %205 : vector<1x256xf32>
    %207 = vector.broadcast %206 : vector<1x256xf32> to vector<16x256xf32>
    %208 = arith.mulf %207, %202 : vector<16x256xf32>
    %209 = arith.addf %192, %208 : vector<16x256xf32>
    %210 = vector.extract_strided_slice %0 {offsets = [12, 0], sizes = [1, 256], strides = [1, 1]} : vector<16x256xf32> to vector<1x256xf32>
    %211 = vector.broadcast %1 : f32 to vector<1x256xf32>
    %212 = arith.mulf %211, %210 : vector<1x256xf32>
    %213 = vector.broadcast %212 : vector<1x256xf32> to vector<16x256xf32>
    %214 = arith.mulf %213, %0 : vector<16x256xf32>
    %cst_26 = arith.constant dense<0xFF800000> : vector<256xf32>
    %215 = vector.multi_reduction <maximumf>, %214, %cst_26 [0] : vector<16x256xf32> to vector<256xf32>
    %216 = vector.shape_cast %215 : vector<256xf32> to vector<1x256xf32>
    %217 = vector.broadcast %216 : vector<1x256xf32> to vector<16x256xf32>
    %218 = arith.subf %214, %217 : vector<16x256xf32>
    %219 = math.exp %218 : vector<16x256xf32>
    %cst_27 = arith.constant dense<0.000000e+00> : vector<256xf32>
    %220 = vector.multi_reduction <add>, %219, %cst_27 [0] : vector<16x256xf32> to vector<256xf32>
    %221 = vector.shape_cast %220 : vector<256xf32> to vector<1x256xf32>
    %222 = tpu.reciprocal %221 {approx = true} : vector<1x256xf32> -> vector<1x256xf32>
    %223 = arith.mulf %210, %222 : vector<1x256xf32>
    %224 = vector.broadcast %223 : vector<1x256xf32> to vector<16x256xf32>
    %225 = arith.mulf %224, %219 : vector<16x256xf32>
    %226 = arith.addf %209, %225 : vector<16x256xf32>
    %227 = vector.extract_strided_slice %0 {offsets = [13, 0], sizes = [1, 256], strides = [1, 1]} : vector<16x256xf32> to vector<1x256xf32>
    %228 = vector.broadcast %1 : f32 to vector<1x256xf32>
    %229 = arith.mulf %228, %227 : vector<1x256xf32>
    %230 = vector.broadcast %229 : vector<1x256xf32> to vector<16x256xf32>
    %231 = arith.mulf %230, %0 : vector<16x256xf32>
    %cst_28 = arith.constant dense<0xFF800000> : vector<256xf32>
    %232 = vector.multi_reduction <maximumf>, %231, %cst_28 [0] : vector<16x256xf32> to vector<256xf32>
    %233 = vector.shape_cast %232 : vector<256xf32> to vector<1x256xf32>
    %234 = vector.broadcast %233 : vector<1x256xf32> to vector<16x256xf32>
    %235 = arith.subf %231, %234 : vector<16x256xf32>
    %236 = math.exp %235 : vector<16x256xf32>
    %cst_29 = arith.constant dense<0.000000e+00> : vector<256xf32>
    %237 = vector.multi_reduction <add>, %236, %cst_29 [0] : vector<16x256xf32> to vector<256xf32>
    %238 = vector.shape_cast %237 : vector<256xf32> to vector<1x256xf32>
    %239 = tpu.reciprocal %238 {approx = true} : vector<1x256xf32> -> vector<1x256xf32>
    %240 = arith.mulf %227, %239 : vector<1x256xf32>
    %241 = vector.broadcast %240 : vector<1x256xf32> to vector<16x256xf32>
    %242 = arith.mulf %241, %236 : vector<16x256xf32>
    %243 = arith.addf %226, %242 : vector<16x256xf32>
    %244 = vector.extract_strided_slice %0 {offsets = [14, 0], sizes = [1, 256], strides = [1, 1]} : vector<16x256xf32> to vector<1x256xf32>
    %245 = vector.broadcast %1 : f32 to vector<1x256xf32>
    %246 = arith.mulf %245, %244 : vector<1x256xf32>
    %247 = vector.broadcast %246 : vector<1x256xf32> to vector<16x256xf32>
    %248 = arith.mulf %247, %0 : vector<16x256xf32>
    %cst_30 = arith.constant dense<0xFF800000> : vector<256xf32>
    %249 = vector.multi_reduction <maximumf>, %248, %cst_30 [0] : vector<16x256xf32> to vector<256xf32>
    %250 = vector.shape_cast %249 : vector<256xf32> to vector<1x256xf32>
    %251 = vector.broadcast %250 : vector<1x256xf32> to vector<16x256xf32>
    %252 = arith.subf %248, %251 : vector<16x256xf32>
    %253 = math.exp %252 : vector<16x256xf32>
    %cst_31 = arith.constant dense<0.000000e+00> : vector<256xf32>
    %254 = vector.multi_reduction <add>, %253, %cst_31 [0] : vector<16x256xf32> to vector<256xf32>
    %255 = vector.shape_cast %254 : vector<256xf32> to vector<1x256xf32>
    %256 = tpu.reciprocal %255 {approx = true} : vector<1x256xf32> -> vector<1x256xf32>
    %257 = arith.mulf %244, %256 : vector<1x256xf32>
    %258 = vector.broadcast %257 : vector<1x256xf32> to vector<16x256xf32>
    %259 = arith.mulf %258, %253 : vector<16x256xf32>
    %260 = arith.addf %243, %259 : vector<16x256xf32>
    %261 = vector.extract_strided_slice %0 {offsets = [15, 0], sizes = [1, 256], strides = [1, 1]} : vector<16x256xf32> to vector<1x256xf32>
    %262 = vector.broadcast %1 : f32 to vector<1x256xf32>
    %263 = arith.mulf %262, %261 : vector<1x256xf32>
    %264 = vector.broadcast %263 : vector<1x256xf32> to vector<16x256xf32>
    %265 = arith.mulf %264, %0 : vector<16x256xf32>
    %cst_32 = arith.constant dense<0xFF800000> : vector<256xf32>
    %266 = vector.multi_reduction <maximumf>, %265, %cst_32 [0] : vector<16x256xf32> to vector<256xf32>
    %267 = vector.shape_cast %266 : vector<256xf32> to vector<1x256xf32>
    %268 = vector.broadcast %267 : vector<1x256xf32> to vector<16x256xf32>
    %269 = arith.subf %265, %268 : vector<16x256xf32>
    %270 = math.exp %269 : vector<16x256xf32>
    %cst_33 = arith.constant dense<0.000000e+00> : vector<256xf32>
    %271 = vector.multi_reduction <add>, %270, %cst_33 [0] : vector<16x256xf32> to vector<256xf32>
    %272 = vector.shape_cast %271 : vector<256xf32> to vector<1x256xf32>
    %273 = tpu.reciprocal %272 {approx = true} : vector<1x256xf32> -> vector<1x256xf32>
    %274 = arith.mulf %261, %273 : vector<1x256xf32>
    %275 = vector.broadcast %274 : vector<1x256xf32> to vector<16x256xf32>
    %276 = arith.mulf %275, %270 : vector<16x256xf32>
    %277 = arith.addf %260, %276 : vector<16x256xf32>
    %278 = vector.broadcast %2 : f32 to vector<16x256xf32>
    %279 = arith.mulf %278, %277 : vector<16x256xf32>
    %c0_34 = arith.constant 0 : index
    %c0_35 = arith.constant 0 : index
    %280 = vector.load %arg3[%c0_34, %c0_35] : memref<32x16xf32, #tpu.memory_space<vmem>>, vector<32x16xf32>
    %cst_36 = arith.constant dense<0.000000e+00> : vector<32x256xf32>
    %281 = tpu.matmul %280, %279, %cst_36 {dimension_numbers = #tpu.dot_dimension_numbers<[1], [0], [0], [1], [0, 0, 1, 1], [], []>} : vector<32x16xf32>, vector<16x256xf32>, vector<32x256xf32> -> vector<32x256xf32>
    %c0_37 = arith.constant 0 : index
    %c0_38 = arith.constant 0 : index
    %282 = vector.load %arg4[%c0_37, %c0_38] : memref<32x1xf32, #tpu.memory_space<vmem>>, vector<32x1xf32>
    %283 = vector.broadcast %282 : vector<32x1xf32> to vector<32x256xf32>
    %284 = arith.addf %281, %283 : vector<32x256xf32>
    %285 = arith.negf %284 : vector<32x256xf32>
    %286 = math.exp %285 : vector<32x256xf32>
    %cst_39 = arith.constant 1.000000e+00 : f32
    %287 = vector.broadcast %cst_39 : f32 to vector<32x256xf32>
    %288 = arith.addf %287, %286 : vector<32x256xf32>
    %289 = arith.divf %287, %288 : vector<32x256xf32>
    %c0_40 = arith.constant 0 : index
    %c0_41 = arith.constant 0 : index
    %290 = vector.load %arg5[%c0_40, %c0_41] : memref<8x32xf32, #tpu.memory_space<vmem>>, vector<8x32xf32>
    %cst_42 = arith.constant dense<0.000000e+00> : vector<8x256xf32>
    %291 = tpu.matmul %290, %289, %cst_42 {dimension_numbers = #tpu.dot_dimension_numbers<[1], [0], [0], [1], [0, 0, 1, 1], [], []>} : vector<8x32xf32>, vector<32x256xf32>, vector<8x256xf32> -> vector<8x256xf32>
    %c0_43 = arith.constant 0 : index
    %c0_44 = arith.constant 0 : index
    %292 = vector.load %arg6[%c0_43, %c0_44] : memref<8x1xf32, #tpu.memory_space<vmem>>, vector<8x1xf32>
    %293 = vector.broadcast %292 : vector<8x1xf32> to vector<8x256xf32>
    %294 = arith.addf %291, %293 : vector<8x256xf32>
    %cst_45 = arith.constant 0.000000e+00 : f32
    %295 = vector.broadcast %cst_45 : f32 to vector<8x256xf32>
    %296 = vector.extract_strided_slice %294 {offsets = [0, 0], sizes = [1, 256], strides = [1, 1]} : vector<8x256xf32> to vector<1x256xf32>
    %297 = vector.broadcast %3 : f32 to vector<1x256xf32>
    %298 = arith.mulf %297, %296 : vector<1x256xf32>
    %299 = vector.broadcast %298 : vector<1x256xf32> to vector<8x256xf32>
    %300 = arith.mulf %299, %294 : vector<8x256xf32>
    %cst_46 = arith.constant dense<0xFF800000> : vector<256xf32>
    %301 = vector.multi_reduction <maximumf>, %300, %cst_46 [0] : vector<8x256xf32> to vector<256xf32>
    %302 = vector.shape_cast %301 : vector<256xf32> to vector<1x256xf32>
    %303 = vector.broadcast %302 : vector<1x256xf32> to vector<8x256xf32>
    %304 = arith.subf %300, %303 : vector<8x256xf32>
    %305 = math.exp %304 : vector<8x256xf32>
    %cst_47 = arith.constant dense<0.000000e+00> : vector<256xf32>
    %306 = vector.multi_reduction <add>, %305, %cst_47 [0] : vector<8x256xf32> to vector<256xf32>
    %307 = vector.shape_cast %306 : vector<256xf32> to vector<1x256xf32>
    %308 = tpu.reciprocal %307 {approx = true} : vector<1x256xf32> -> vector<1x256xf32>
    %309 = arith.mulf %296, %308 : vector<1x256xf32>
    %310 = vector.broadcast %309 : vector<1x256xf32> to vector<8x256xf32>
    %311 = arith.mulf %310, %305 : vector<8x256xf32>
    %312 = arith.addf %295, %311 : vector<8x256xf32>
    %313 = vector.extract_strided_slice %294 {offsets = [1, 0], sizes = [1, 256], strides = [1, 1]} : vector<8x256xf32> to vector<1x256xf32>
    %314 = vector.broadcast %3 : f32 to vector<1x256xf32>
    %315 = arith.mulf %314, %313 : vector<1x256xf32>
    %316 = vector.broadcast %315 : vector<1x256xf32> to vector<8x256xf32>
    %317 = arith.mulf %316, %294 : vector<8x256xf32>
    %cst_48 = arith.constant dense<0xFF800000> : vector<256xf32>
    %318 = vector.multi_reduction <maximumf>, %317, %cst_48 [0] : vector<8x256xf32> to vector<256xf32>
    %319 = vector.shape_cast %318 : vector<256xf32> to vector<1x256xf32>
    %320 = vector.broadcast %319 : vector<1x256xf32> to vector<8x256xf32>
    %321 = arith.subf %317, %320 : vector<8x256xf32>
    %322 = math.exp %321 : vector<8x256xf32>
    %cst_49 = arith.constant dense<0.000000e+00> : vector<256xf32>
    %323 = vector.multi_reduction <add>, %322, %cst_49 [0] : vector<8x256xf32> to vector<256xf32>
    %324 = vector.shape_cast %323 : vector<256xf32> to vector<1x256xf32>
    %325 = tpu.reciprocal %324 {approx = true} : vector<1x256xf32> -> vector<1x256xf32>
    %326 = arith.mulf %313, %325 : vector<1x256xf32>
    %327 = vector.broadcast %326 : vector<1x256xf32> to vector<8x256xf32>
    %328 = arith.mulf %327, %322 : vector<8x256xf32>
    %329 = arith.addf %312, %328 : vector<8x256xf32>
    %330 = vector.extract_strided_slice %294 {offsets = [2, 0], sizes = [1, 256], strides = [1, 1]} : vector<8x256xf32> to vector<1x256xf32>
    %331 = vector.broadcast %3 : f32 to vector<1x256xf32>
    %332 = arith.mulf %331, %330 : vector<1x256xf32>
    %333 = vector.broadcast %332 : vector<1x256xf32> to vector<8x256xf32>
    %334 = arith.mulf %333, %294 : vector<8x256xf32>
    %cst_50 = arith.constant dense<0xFF800000> : vector<256xf32>
    %335 = vector.multi_reduction <maximumf>, %334, %cst_50 [0] : vector<8x256xf32> to vector<256xf32>
    %336 = vector.shape_cast %335 : vector<256xf32> to vector<1x256xf32>
    %337 = vector.broadcast %336 : vector<1x256xf32> to vector<8x256xf32>
    %338 = arith.subf %334, %337 : vector<8x256xf32>
    %339 = math.exp %338 : vector<8x256xf32>
    %cst_51 = arith.constant dense<0.000000e+00> : vector<256xf32>
    %340 = vector.multi_reduction <add>, %339, %cst_51 [0] : vector<8x256xf32> to vector<256xf32>
    %341 = vector.shape_cast %340 : vector<256xf32> to vector<1x256xf32>
    %342 = tpu.reciprocal %341 {approx = true} : vector<1x256xf32> -> vector<1x256xf32>
    %343 = arith.mulf %330, %342 : vector<1x256xf32>
    %344 = vector.broadcast %343 : vector<1x256xf32> to vector<8x256xf32>
    %345 = arith.mulf %344, %339 : vector<8x256xf32>
    %346 = arith.addf %329, %345 : vector<8x256xf32>
    %347 = vector.extract_strided_slice %294 {offsets = [3, 0], sizes = [1, 256], strides = [1, 1]} : vector<8x256xf32> to vector<1x256xf32>
    %348 = vector.broadcast %3 : f32 to vector<1x256xf32>
    %349 = arith.mulf %348, %347 : vector<1x256xf32>
    %350 = vector.broadcast %349 : vector<1x256xf32> to vector<8x256xf32>
    %351 = arith.mulf %350, %294 : vector<8x256xf32>
    %cst_52 = arith.constant dense<0xFF800000> : vector<256xf32>
    %352 = vector.multi_reduction <maximumf>, %351, %cst_52 [0] : vector<8x256xf32> to vector<256xf32>
    %353 = vector.shape_cast %352 : vector<256xf32> to vector<1x256xf32>
    %354 = vector.broadcast %353 : vector<1x256xf32> to vector<8x256xf32>
    %355 = arith.subf %351, %354 : vector<8x256xf32>
    %356 = math.exp %355 : vector<8x256xf32>
    %cst_53 = arith.constant dense<0.000000e+00> : vector<256xf32>
    %357 = vector.multi_reduction <add>, %356, %cst_53 [0] : vector<8x256xf32> to vector<256xf32>
    %358 = vector.shape_cast %357 : vector<256xf32> to vector<1x256xf32>
    %359 = tpu.reciprocal %358 {approx = true} : vector<1x256xf32> -> vector<1x256xf32>
    %360 = arith.mulf %347, %359 : vector<1x256xf32>
    %361 = vector.broadcast %360 : vector<1x256xf32> to vector<8x256xf32>
    %362 = arith.mulf %361, %356 : vector<8x256xf32>
    %363 = arith.addf %346, %362 : vector<8x256xf32>
    %364 = vector.extract_strided_slice %294 {offsets = [4, 0], sizes = [1, 256], strides = [1, 1]} : vector<8x256xf32> to vector<1x256xf32>
    %365 = vector.broadcast %3 : f32 to vector<1x256xf32>
    %366 = arith.mulf %365, %364 : vector<1x256xf32>
    %367 = vector.broadcast %366 : vector<1x256xf32> to vector<8x256xf32>
    %368 = arith.mulf %367, %294 : vector<8x256xf32>
    %cst_54 = arith.constant dense<0xFF800000> : vector<256xf32>
    %369 = vector.multi_reduction <maximumf>, %368, %cst_54 [0] : vector<8x256xf32> to vector<256xf32>
    %370 = vector.shape_cast %369 : vector<256xf32> to vector<1x256xf32>
    %371 = vector.broadcast %370 : vector<1x256xf32> to vector<8x256xf32>
    %372 = arith.subf %368, %371 : vector<8x256xf32>
    %373 = math.exp %372 : vector<8x256xf32>
    %cst_55 = arith.constant dense<0.000000e+00> : vector<256xf32>
    %374 = vector.multi_reduction <add>, %373, %cst_55 [0] : vector<8x256xf32> to vector<256xf32>
    %375 = vector.shape_cast %374 : vector<256xf32> to vector<1x256xf32>
    %376 = tpu.reciprocal %375 {approx = true} : vector<1x256xf32> -> vector<1x256xf32>
    %377 = arith.mulf %364, %376 : vector<1x256xf32>
    %378 = vector.broadcast %377 : vector<1x256xf32> to vector<8x256xf32>
    %379 = arith.mulf %378, %373 : vector<8x256xf32>
    %380 = arith.addf %363, %379 : vector<8x256xf32>
    %381 = vector.extract_strided_slice %294 {offsets = [5, 0], sizes = [1, 256], strides = [1, 1]} : vector<8x256xf32> to vector<1x256xf32>
    %382 = vector.broadcast %3 : f32 to vector<1x256xf32>
    %383 = arith.mulf %382, %381 : vector<1x256xf32>
    %384 = vector.broadcast %383 : vector<1x256xf32> to vector<8x256xf32>
    %385 = arith.mulf %384, %294 : vector<8x256xf32>
    %cst_56 = arith.constant dense<0xFF800000> : vector<256xf32>
    %386 = vector.multi_reduction <maximumf>, %385, %cst_56 [0] : vector<8x256xf32> to vector<256xf32>
    %387 = vector.shape_cast %386 : vector<256xf32> to vector<1x256xf32>
    %388 = vector.broadcast %387 : vector<1x256xf32> to vector<8x256xf32>
    %389 = arith.subf %385, %388 : vector<8x256xf32>
    %390 = math.exp %389 : vector<8x256xf32>
    %cst_57 = arith.constant dense<0.000000e+00> : vector<256xf32>
    %391 = vector.multi_reduction <add>, %390, %cst_57 [0] : vector<8x256xf32> to vector<256xf32>
    %392 = vector.shape_cast %391 : vector<256xf32> to vector<1x256xf32>
    %393 = tpu.reciprocal %392 {approx = true} : vector<1x256xf32> -> vector<1x256xf32>
    %394 = arith.mulf %381, %393 : vector<1x256xf32>
    %395 = vector.broadcast %394 : vector<1x256xf32> to vector<8x256xf32>
    %396 = arith.mulf %395, %390 : vector<8x256xf32>
    %397 = arith.addf %380, %396 : vector<8x256xf32>
    %398 = vector.extract_strided_slice %294 {offsets = [6, 0], sizes = [1, 256], strides = [1, 1]} : vector<8x256xf32> to vector<1x256xf32>
    %399 = vector.broadcast %3 : f32 to vector<1x256xf32>
    %400 = arith.mulf %399, %398 : vector<1x256xf32>
    %401 = vector.broadcast %400 : vector<1x256xf32> to vector<8x256xf32>
    %402 = arith.mulf %401, %294 : vector<8x256xf32>
    %cst_58 = arith.constant dense<0xFF800000> : vector<256xf32>
    %403 = vector.multi_reduction <maximumf>, %402, %cst_58 [0] : vector<8x256xf32> to vector<256xf32>
    %404 = vector.shape_cast %403 : vector<256xf32> to vector<1x256xf32>
    %405 = vector.broadcast %404 : vector<1x256xf32> to vector<8x256xf32>
    %406 = arith.subf %402, %405 : vector<8x256xf32>
    %407 = math.exp %406 : vector<8x256xf32>
    %cst_59 = arith.constant dense<0.000000e+00> : vector<256xf32>
    %408 = vector.multi_reduction <add>, %407, %cst_59 [0] : vector<8x256xf32> to vector<256xf32>
    %409 = vector.shape_cast %408 : vector<256xf32> to vector<1x256xf32>
    %410 = tpu.reciprocal %409 {approx = true} : vector<1x256xf32> -> vector<1x256xf32>
    %411 = arith.mulf %398, %410 : vector<1x256xf32>
    %412 = vector.broadcast %411 : vector<1x256xf32> to vector<8x256xf32>
    %413 = arith.mulf %412, %407 : vector<8x256xf32>
    %414 = arith.addf %397, %413 : vector<8x256xf32>
    %415 = vector.extract_strided_slice %294 {offsets = [7, 0], sizes = [1, 256], strides = [1, 1]} : vector<8x256xf32> to vector<1x256xf32>
    %416 = vector.broadcast %3 : f32 to vector<1x256xf32>
    %417 = arith.mulf %416, %415 : vector<1x256xf32>
    %418 = vector.broadcast %417 : vector<1x256xf32> to vector<8x256xf32>
    %419 = arith.mulf %418, %294 : vector<8x256xf32>
    %cst_60 = arith.constant dense<0xFF800000> : vector<256xf32>
    %420 = vector.multi_reduction <maximumf>, %419, %cst_60 [0] : vector<8x256xf32> to vector<256xf32>
    %421 = vector.shape_cast %420 : vector<256xf32> to vector<1x256xf32>
    %422 = vector.broadcast %421 : vector<1x256xf32> to vector<8x256xf32>
    %423 = arith.subf %419, %422 : vector<8x256xf32>
    %424 = math.exp %423 : vector<8x256xf32>
    %cst_61 = arith.constant dense<0.000000e+00> : vector<256xf32>
    %425 = vector.multi_reduction <add>, %424, %cst_61 [0] : vector<8x256xf32> to vector<256xf32>
    %426 = vector.shape_cast %425 : vector<256xf32> to vector<1x256xf32>
    %427 = tpu.reciprocal %426 {approx = true} : vector<1x256xf32> -> vector<1x256xf32>
    %428 = arith.mulf %415, %427 : vector<1x256xf32>
    %429 = vector.broadcast %428 : vector<1x256xf32> to vector<8x256xf32>
    %430 = arith.mulf %429, %424 : vector<8x256xf32>
    %431 = arith.addf %414, %430 : vector<8x256xf32>
    %432 = vector.broadcast %4 : f32 to vector<8x256xf32>
    %433 = arith.mulf %432, %431 : vector<8x256xf32>
    %cst_62 = arith.constant dense<0xFF800000> : vector<256xf32>
    %434 = vector.multi_reduction <maximumf>, %433, %cst_62 [0] : vector<8x256xf32> to vector<256xf32>
    %435 = vector.shape_cast %434 : vector<256xf32> to vector<1x256xf32>
    %436 = vector.broadcast %435 : vector<1x256xf32> to vector<8x256xf32>
    %437 = arith.subf %433, %436 : vector<8x256xf32>
    %438 = math.exp %437 : vector<8x256xf32>
    %cst_63 = arith.constant dense<0.000000e+00> : vector<256xf32>
    %439 = vector.multi_reduction <add>, %438, %cst_63 [0] : vector<8x256xf32> to vector<256xf32>
    %440 = vector.shape_cast %439 : vector<256xf32> to vector<1x256xf32>
    %441 = vector.broadcast %440 : vector<1x256xf32> to vector<8x256xf32>
    %442 = arith.divf %438, %441 : vector<8x256xf32>
    %443 = vector.extract_strided_slice %0 {offsets = [8, 0], sizes = [8, 256], strides = [1, 1]} : vector<16x256xf32> to vector<8x256xf32>
    %444 = arith.mulf %443, %442 : vector<8x256xf32>
    %cst_64 = arith.constant dense<0.000000e+00> : vector<256xf32>
    %445 = vector.multi_reduction <add>, %444, %cst_64 [0] : vector<8x256xf32> to vector<256xf32>
    %446 = vector.shape_cast %445 : vector<256xf32> to vector<1x256xf32>
    %c0_65 = arith.constant 0 : index
    %c0_66 = arith.constant 0 : index
    %447 = vector.load %arg7[%c0_65, %c0_66] : memref<1x256xf32, #tpu.memory_space<vmem>>, vector<1x256xf32>
    tpu.vector_store %arg7[%c0_65, %c0_66], %446 {strides = array<i32>} : memref<1x256xf32, #tpu.memory_space<vmem>>, vector<1x256xf32>,
    return
  }
  func.func @transform_0(%arg0: i32) -> i32 {
    %c0_i32 = arith.constant 0 : i32
    %c0_i32_0 = arith.constant 0 : i32
    return %c0_i32 : i32
  }
  func.func @transform_1(%arg0: i32) -> (i32, i32) {
    %c0_i32 = arith.constant 0 : i32
    %c0_i32_0 = arith.constant 0 : i32
    return %c0_i32, %arg0 : i32, i32
  }
  func.func @transform_2(%arg0: i32) -> (i32, i32) {
    %c0_i32 = arith.constant 0 : i32
    %c0_i32_0 = arith.constant 0 : i32
    %c0_i32_1 = arith.constant 0 : i32
    return %c0_i32, %c0_i32_0 : i32, i32
  }
  func.func @transform_3(%arg0: i32) -> (i32, i32) {
    %c0_i32 = arith.constant 0 : i32
    %c0_i32_0 = arith.constant 0 : i32
    %c0_i32_1 = arith.constant 0 : i32
    return %c0_i32, %c0_i32_0 : i32, i32
  }
  func.func @transform_4(%arg0: i32) -> (i32, i32) {
    %c0_i32 = arith.constant 0 : i32
    %c0_i32_0 = arith.constant 0 : i32
    %c0_i32_1 = arith.constant 0 : i32
    return %c0_i32, %c0_i32_0 : i32, i32
  }
  func.func @transform_5(%arg0: i32) -> (i32, i32) {
    %c0_i32 = arith.constant 0 : i32
    %c0_i32_0 = arith.constant 0 : i32
    %c0_i32_1 = arith.constant 0 : i32
    return %c0_i32, %c0_i32_0 : i32, i32
  }
  func.func @transform_6(%arg0: i32) -> (i32, i32) {
    %c0_i32 = arith.constant 0 : i32
    %c0_i32_0 = arith.constant 0 : i32
    return %c0_i32, %arg0 : i32, i32
  }
}

</mosaic_0001>

<llo_original>
// kernel: tpu_custom_call.1
$region0: #{tpu_custom_call.1}
  #allocation0 [shape = 'u32[]', space=smem, size = 0x4, offset = 0x4, fixed_abs, tag = 'smem constant byte address 0x4 - core index']
  #allocation1 [shape = 'u32[144,128]{1,0:T(1,128)}', space=vmem, size = 0x12000, scoped, tag = 'internal scratch']
  %s0 = inlined_call_operand.vmem [shape: f32[4], index: 0, kind: input, shape index: {}]
  %s1 = inlined_call_operand.vmem [shape: f32[16,512], index: 1, kind: input, shape index: {}]
  %s2 = inlined_call_operand.vmem [shape: f32[32,16], index: 2, kind: input, shape index: {}]
  %s3 = inlined_call_operand.vmem [shape: f32[32,1], index: 3, kind: input, shape index: {}]
  %s4 = inlined_call_operand.vmem [shape: f32[8,32], index: 4, kind: input, shape index: {}]
  %s5 = inlined_call_operand.vmem [shape: f32[8,1], index: 5, kind: input, shape index: {}]
  %s6 = inlined_call_operand.hbm [shape: f32[1,512], index: 6, kind: output, shape index: {}]
  %s7 = sld [smem:[#allocation0]]
  $region84: #{tpu_custom_call.1} parent=0
    _
  %s9 = ssub.s32 1, %s7
  %s10 = scalar_select 0, %s9, %s7
  $region1: #{tpu_custom_call.1} parent=0
    #allocation2 [shape = 'u8[512]{0}', space=smem, size = 0x200, scoped, tag = 'input window, operand 0, single buffered']
    #allocation3 [shape = 's32[2]{0}', space=sflag, size = 0x8, scoped, tag = 'scoped memory for tpu_custom_call.1']
    #allocation4 [shape = 's32[2]{0}', space=sflag, size = 0x8, scoped, tag = 'scoped memory for tpu_custom_call.1']
    #allocation5 [shape = 'u8[32768]{0}', space=vmem, size = 0x8000, scoped, tag = 'input window, operand 1']
    #allocation6 [shape = 'u8[2048]{0}', space=vmem, size = 0x800, scoped, tag = 'output window, operand 0']
    %11 = vsyncpa [#allocation4], 0
    %12 = vsyncpa [#allocation3], 0
    %s13 = scalar_lea.sflag [#allocation3], 1
    %14 = vsyncpa %s13, 0
    loop: start=0, step=1, limit=4
    $region2: #{tpu_custom_call.1} parent=1 // loop_pre_header
      _
    $region3: #{tpu_custom_call.1} parent=1 // loop_header
      %s16 = sphi 0, %s20
      %p17 = scmp.ge.s32.totalorder %s16, 4
      %s24 = sphi 0, %s24
      %s26 = sphi 0, %s24
      %s27 = sphi 0, %s26
      %s41 = sphi 0, %s27
      %s47 = sphi 0, %s49
      %s50 = sphi 0, %s47
      %s51 = sphi 0, %s50
      %s67 = sphi 0, %s51
      %s71 = sphi 0, %s71
      %s73 = sphi 0, %s71
      %s74 = sphi 0, %s73
      %s88 = sphi 0, %s74
      %s92 = sphi 0, %s92
      %s94 = sphi 0, %s92
      %s95 = sphi 0, %s94
      %s109 = sphi 0, %s95
      %s113 = sphi 0, %s113
      %s115 = sphi 0, %s113
      %s116 = sphi 0, %s115
      %s130 = sphi 0, %s116
      %s134 = sphi 0, %s134
      %s136 = sphi 0, %s134
      %s137 = sphi 0, %s136
      %s151 = sphi 0, %s137
      %s157 = sphi 0, %s159
      %s160 = sphi 0, %s157
      %s161 = sphi 0, %s160
      %s177 = sphi 0, %s161
    $region4: #{tpu_custom_call.1} parent=1 // loop_header_branch
      %19 = sbr.rel (%p17) target = $region8
    $region5: #{tpu_custom_call.1} parent=1 // loop_body
      %s21 = ssub.s32 %s16, 1
      %s22 = ssub.s32 %s16, 2
      %s23 = sadd.s32 %s16, 1
      %s25 = sadd.s32 %s24, 1
      %p28 = scmp.eq.s32.totalorder %s16, 1
      %p29 = scmp.ne.s32.totalorder %s24, %s26
      %p30 = scmp.eq.s32.totalorder %s16, 0
      %p31 = por %p29, %p30
      %p32 = scmp.ne.s32.totalorder %s24, %s26
      %p33 = scmp.eq.s32.totalorder %s21, 1
      %p34 = por %p32, %p33
      %p35 = scmp.ne.s32.totalorder %s26, %s27
      %p36 = scmp.eq.s32.totalorder %s21, 0
      %p37 = por %p35, %p36
      %p38 = scmp.ne.s32.totalorder %s26, %s27
      %p39 = scmp.eq.s32.totalorder %s22, 1
      %p40 = por %p38, %p39
      %p42 = scmp.ne.s32.totalorder %s27, %s41
      %p43 = scmp.eq.s32.totalorder %s22, 0
      %p44 = por %p42, %p43
      %s45 = ssub.s32 %s16, %s23
      %p46 = scmp.eq.s32.totalorder %s45, 0
      %s48 = sadd.s32 %s47, 1
      %s49 = scalar_select %p46, %s47, %s48
      %p52 = pneg %p46
      %p53 = scmp.eq.s32.totalorder %s16, 1
      %p54 = por %p52, %p53
      %p55 = scmp.ne.s32.totalorder %s47, %s50
      %p56 = scmp.eq.s32.totalorder %s16, 0
      %p57 = por %p55, %p56
      %p58 = scmp.ne.s32.totalorder %s47, %s50
      %p59 = scmp.eq.s32.totalorder %s21, 1
      %p60 = por %p58, %p59
      %p61 = scmp.ne.s32.totalorder %s50, %s51
      %p62 = scmp.eq.s32.totalorder %s21, 0
      %p63 = por %p61, %p62
      %p64 = scmp.ne.s32.totalorder %s50, %s51
      %p65 = scmp.eq.s32.totalorder %s22, 1
      %p66 = por %p64, %p65
      %p68 = scmp.ne.s32.totalorder %s51, %s67
      %p69 = scmp.eq.s32.totalorder %s22, 0
      %p70 = por %p68, %p69
      %s72 = sadd.s32 %s71, 1
      %p75 = scmp.eq.s32.totalorder %s16, 1
      %p76 = scmp.ne.s32.totalorder %s71, %s73
      %p77 = scmp.eq.s32.totalorder %s16, 0
      %p78 = por %p76, %p77
      %p79 = scmp.ne.s32.totalorder %s71, %s73
      %p80 = scmp.eq.s32.totalorder %s21, 1
      %p81 = por %p79, %p80
      %p82 = scmp.ne.s32.totalorder %s73, %s74
      %p83 = scmp.eq.s32.totalorder %s21, 0
      %p84 = por %p82, %p83
      %p85 = scmp.ne.s32.totalorder %s73, %s74
      %p86 = scmp.eq.s32.totalorder %s22, 1
      %p87 = por %p85, %p86
      %p89 = scmp.ne.s32.totalorder %s74, %s88
      %p90 = scmp.eq.s32.totalorder %s22, 0
      %p91 = por %p89, %p90
      %s93 = sadd.s32 %s92, 1
      %p96 = scmp.eq.s32.totalorder %s16, 1
      %p97 = scmp.ne.s32.totalorder %s92, %s94
      %p98 = scmp.eq.s32.totalorder %s16, 0
      %p99 = por %p97, %p98
      %p100 = scmp.ne.s32.totalorder %s92, %s94
      %p101 = scmp.eq.s32.totalorder %s21, 1
      %p102 = por %p100, %p101
      %p103 = scmp.ne.s32.totalorder %s94, %s95
      %p104 = scmp.eq.s32.totalorder %s21, 0
      %p105 = por %p103, %p104
      %p106 = scmp.ne.s32.totalorder %s94, %s95
      %p107 = scmp.eq.s32.totalorder %s22, 1
      %p108 = por %p106, %p107
      %p110 = scmp.ne.s32.totalorder %s95, %s109
      %p111 = scmp.eq.s32.totalorder %s22, 0
      %p112 = por %p110, %p111
      %s114 = sadd.s32 %s113, 1
      %p117 = scmp.eq.s32.totalorder %s16, 1
      %p118 = scmp.ne.s32.totalorder %s113, %s115
      %p119 = scmp.eq.s32.totalorder %s16, 0
      %p120 = por %p118, %p119
      %p121 = scmp.ne.s32.totalorder %s113, %s115
      %p122 = scmp.eq.s32.totalorder %s21, 1
      %p123 = por %p121, %p122
      %p124 = scmp.ne.s32.totalorder %s115, %s116
      %p125 = scmp.eq.s32.totalorder %s21, 0
      %p126 = por %p124, %p125
      %p127 = scmp.ne.s32.totalorder %s115, %s116
      %p128 = scmp.eq.s32.totalorder %s22, 1
      %p129 = por %p127, %p128
      %p131 = scmp.ne.s32.totalorder %s116, %s130
      %p132 = scmp.eq.s32.totalorder %s22, 0
      %p133 = por %p131, %p132
      %s135 = sadd.s32 %s134, 1
      %p138 = scmp.eq.s32.totalorder %s16, 1
      %p139 = scmp.ne.s32.totalorder %s134, %s136
      %p140 = scmp.eq.s32.totalorder %s16, 0
      %p141 = por %p139, %p140
      %p142 = scmp.ne.s32.totalorder %s134, %s136
      %p143 = scmp.eq.s32.totalorder %s21, 1
      %p144 = por %p142, %p143
      %p145 = scmp.ne.s32.totalorder %s136, %s137
      %p146 = scmp.eq.s32.totalorder %s21, 0
      %p147 = por %p145, %p146
      %p148 = scmp.ne.s32.totalorder %s136, %s137
      %p149 = scmp.eq.s32.totalorder %s22, 1
      %p150 = por %p148, %p149
      %p152 = scmp.ne.s32.totalorder %s137, %s151
      %p153 = scmp.eq.s32.totalorder %s22, 0
      %p154 = por %p152, %p153
      %s155 = ssub.s32 %s16, %s23
      %p156 = scmp.eq.s32.totalorder %s155, 0
      %s158 = sadd.s32 %s157, 1
      %s159 = scalar_select %p156, %s157, %s158
      %p162 = pneg %p156
      %p163 = scmp.eq.s32.totalorder %s16, 1
      %p164 = por %p162, %p163
      %p165 = scmp.ne.s32.totalorder %s157, %s160
      %p166 = scmp.eq.s32.totalorder %s16, 0
      %p167 = por %p165, %p166
      %p168 = scmp.ne.s32.totalorder %s157, %s160
      %p169 = scmp.eq.s32.totalorder %s21, 1
      %p170 = por %p168, %p169
      %p171 = scmp.ne.s32.totalorder %s160, %s161
      %p172 = scmp.eq.s32.totalorder %s21, 0
      %p173 = por %p171, %p172
      %p174 = scmp.ne.s32.totalorder %s160, %s161
      %p175 = scmp.eq.s32.totalorder %s22, 1
      %p176 = por %p174, %p175
      %p178 = scmp.ne.s32.totalorder %s161, %s177
      %p179 = scmp.eq.s32.totalorder %s22, 0
      %p180 = por %p178, %p179
      %p181 = scmp.le.s32.totalorder 1, %s16
      %p182 = scmp.lt.s32.totalorder %s16, 3
      %p183 = pnand %p181, %p182
      %p184 = pneg %p183
      // Predicated region
      $region9: #{tpu_custom_call.1} parent=5 // pred_check
        _
      $region10: #{tpu_custom_call.1} parent=5 // pred_check_branch
        %186 = sbr.rel (%p183) target = $region12
      $region11: #{tpu_custom_call.1} parent=5 // pred_region
        %s187 = ssub.s32 %s16, 1
        // Predicated region
        $region13: #{tpu_custom_call.1} parent=11 // pred_check
          %p188 = pneg %p37
        $region14: #{tpu_custom_call.1} parent=11 // pred_check_branch
          %190 = sbr.rel (%p188) target = $region16
        $region15: #{tpu_custom_call.1} parent=11 // pred_region
          %s192 = ssub.s32 16, 16
          %193 = vsyncadd [#allocation4], %s192
          %s195 = sshll.u32 %s0, 4
          %s196 = int_to_ptr.vmem [resolvable:$true] %s195
          %198 = dma.vmem_to_smem %s196, 16, [#allocation2], [#allocation4]
        $region16: #{tpu_custom_call.1} parent=11 // pred_fallthru
          _
        // Predicated region
        $region17: #{tpu_custom_call.1} parent=11 // pred_check
          %p199 = pneg %p84
        $region18: #{tpu_custom_call.1} parent=11 // pred_check_branch
          %201 = sbr.rel (%p199) target = $region20
        $region19: #{tpu_custom_call.1} parent=11 // pred_region
          _
        $region20: #{tpu_custom_call.1} parent=11 // pred_fallthru
          _
        // Predicated region
        $region21: #{tpu_custom_call.1} parent=11 // pred_check
          %p202 = pneg %p105
        $region22: #{tpu_custom_call.1} parent=11 // pred_check_branch
          %204 = sbr.rel (%p202) target = $region24
        $region23: #{tpu_custom_call.1} parent=11 // pred_region
          _
        $region24: #{tpu_custom_call.1} parent=11 // pred_fallthru
          _
        // Predicated region
        $region25: #{tpu_custom_call.1} parent=11 // pred_check
          %p205 = pneg %p126
        $region26: #{tpu_custom_call.1} parent=11 // pred_check_branch
          %207 = sbr.rel (%p205) target = $region28
        $region27: #{tpu_custom_call.1} parent=11 // pred_region
          _
        $region28: #{tpu_custom_call.1} parent=11 // pred_fallthru
          _
        // Predicated region
        $region29: #{tpu_custom_call.1} parent=11 // pred_check
          %p208 = pneg %p147
        $region30: #{tpu_custom_call.1} parent=11 // pred_check_branch
          %210 = sbr.rel (%p208) target = $region32
        $region31: #{tpu_custom_call.1} parent=11 // pred_region
          _
        $region32: #{tpu_custom_call.1} parent=11 // pred_fallthru
          _
      $region12: #{tpu_custom_call.1} parent=5 // pred_fallthru
        _
      %p211 = scmp.lt.s32.totalorder %s16, 2
      // Predicated region
      $region33: #{tpu_custom_call.1} parent=5 // pred_check
        %p212 = pneg %p211
      $region34: #{tpu_custom_call.1} parent=5 // pred_check_branch
        %214 = sbr.rel (%p212) target = $region36
      $region35: #{tpu_custom_call.1} parent=5 // pred_region
        // Predicated region
        $region37: #{tpu_custom_call.1} parent=35 // pred_check
          %p215 = pneg %p57
        $region38: #{tpu_custom_call.1} parent=35 // pred_check_branch
          %217 = sbr.rel (%p215) target = $region40
        $region39: #{tpu_custom_call.1} parent=35 // pred_region
          %s218 = sand.u32 %s47, 1
          %s219 = sand.u32 %s47, 1
          %s220 = smul.addr %s219, 32
          %s221 = scalar_lea.vmem [#allocation5], %s220
          %s222 = smul.u32 2, %s16
          %s223 = smul.addr %s222, 8
          %s224 = scalar_lea.vmem %s1, %s223
          // Predicated region
          $region41: #{tpu_custom_call.1} parent=39 // pred_check
            _
          $region42: #{tpu_custom_call.1} parent=39 // pred_check_branch
            %226 = sbr.rel (0) target = $region44
          $region43: #{tpu_custom_call.1} parent=39 // pred_region
            // Predicated region
            $region45: #{tpu_custom_call.1} parent=43 // pred_check
              _
            $region46: #{tpu_custom_call.1} parent=43 // pred_check_branch
              %228 = sbr.rel (0) target = $region48
            $region47: #{tpu_custom_call.1} parent=43 // pred_region
              loop: start=0, step=1, limit=1
              $region49: #{tpu_custom_call.1} parent=47 // loop_pre_header
                _
              $region50: #{tpu_custom_call.1} parent=47 // loop_header
                %s230 = sphi 0, %s234
                %p231 = scmp.ge.s32.totalorder %s230, 1
                %s235 = sphi %s224, %s224
                %s236 = sphi %s221, %s221
              $region51: #{tpu_custom_call.1} parent=47 // loop_header_branch
                %233 = sbr.rel (%p231) target = $region55
              $region52: #{tpu_custom_call.1} parent=47 // loop_body
                %v237 = vld [vmem:[%s235] sm:$0xff]
                %238 = vst [vmem:[%s236] sm:$0xff] %v237
                %v239 = vld [vmem:[%s235 + $0x8] sm:$0xff]
                %240 = vst [vmem:[%s236 + $0x8] sm:$0xff] %v239
                %v241 = vld [vmem:[%s235 + $0x20] sm:$0xff]
                %242 = vst [vmem:[%s236 + $0x10] sm:$0xff] %v241
                %v243 = vld [vmem:[%s235 + $0x28] sm:$0xff]
                %244 = vst [vmem:[%s236 + $0x18] sm:$0xff] %v243
              $region53: #{tpu_custom_call.1} parent=47 // loop_footer
                %s234 = sadd.s32 1, %s230
              $region54: #{tpu_custom_call.1} parent=47 // loop_footer_branch
                %229 = sbr.rel target = $region50
              $region55: #{tpu_custom_call.1} parent=47 // loop_exit
                _
            $region48: #{tpu_custom_call.1} parent=43 // pred_fallthru
              _
            // Predicated region
            $region56: #{tpu_custom_call.1} parent=43 // pred_check
              _
            $region57: #{tpu_custom_call.1} parent=43 // pred_check_branch
              %246 = sbr.rel target = $region59
            $region58: #{tpu_custom_call.1} parent=43 // pred_region
              _
            $region59: #{tpu_custom_call.1} parent=43 // pred_fallthru
              _
          $region44: #{tpu_custom_call.1} parent=39 // pred_fallthru
            _
          %247 = vnop
        $region40: #{tpu_custom_call.1} parent=35 // pred_fallthru
          _
      $region36: #{tpu_custom_call.1} parent=5 // pred_fallthru
        _
      %p248 = scmp.le.s32.totalorder 1, %s16
      %p249 = scmp.lt.s32.totalorder %s16, 3
      %p250 = pnand %p248, %p249
      %p251 = pneg %p250
      // Predicated region
      $region60: #{tpu_custom_call.1} parent=5 // pred_check
        _
      $region61: #{tpu_custom_call.1} parent=5 // pred_check_branch
        %253 = sbr.rel (%p250) target = $region63
      $region62: #{tpu_custom_call.1} parent=5 // pred_region
        %s254 = ssub.s32 %s16, 1
        // Predicated region
        $region64: #{tpu_custom_call.1} parent=62 // pred_check
          %p255 = pneg %p37
        $region65: #{tpu_custom_call.1} parent=62 // pred_check_branch
          %257 = sbr.rel (%p255) target = $region67
        $region66: #{tpu_custom_call.1} parent=62 // pred_region
          %258 = dma.done [#allocation4], 16
        $region67: #{tpu_custom_call.1} parent=62 // pred_fallthru
          _
        %s259 = sand.u32 %s50, 1
        %s260 = sand.u32 %s50, 1
        %s261 = smul.addr %s260, 32
        %s262 = scalar_lea.vmem [#allocation5], %s261
        // Predicated region
        $region68: #{tpu_custom_call.1} parent=62 // pred_check
          %p263 = pneg %p63
        $region69: #{tpu_custom_call.1} parent=62 // pred_check_branch
          %265 = sbr.rel (%p263) target = $region71
        $region70: #{tpu_custom_call.1} parent=62 // pred_region
          _
        $region71: #{tpu_custom_call.1} parent=62 // pred_fallthru
          _
        %266 = sfence
        %p267 = pneg %p37
        %p268 = pneg %p34
        %s269 = sand.u32 %s50, 1
        %s270 = sand.u32 %s50, 1
        %s271 = smul.addr %s270, 32
        %s272 = scalar_lea.vmem [#allocation5], %s271
        %p273 = pneg %p63
        %p274 = pneg %p60
        %p275 = pneg %p84
        %p276 = pneg %p81
        %p277 = pneg %p105
        %p278 = pneg %p102
        %p279 = pneg %p126
        %p280 = pneg %p123
        %p281 = pneg %p147
        %p282 = pneg %p144
        %p283 = pneg %p173
        %p284 = pneg %p170
        %s285 = sand.u32 %s160, 1
        %s286 = scalar_lea.sflag [#allocation3], %s285
        %s287 = sand.u32 %s160, 1
        %s288 = smul.addr %s287, 2
        %s289 = scalar_lea.vmem [#allocation6], %s288
        %s290 = smul.u32 2, %s21
        %s291 = smul.u32 2, %s21
        %v292 = vld [vmem:[%s262] sm:$0xff]
        %v293 = vld [vmem:[%s262 + $0x8] sm:$0xff]
        %v294 = vld [vmem:[%s262 + $0x10] sm:$0xff]
        %v295 = vld [vmem:[%s262 + $0x18] sm:$0xff]
        %s296 = sld [smem:[#allocation2]]
        %s297 = sld [smem:[#allocation2 + $0x1]]
        %s298 = sld [smem:[#allocation2 + $0x2]]
        %s299 = sld [smem:[#allocation2 + $0x3]]
        %v300 = vstv %s296
        %v301 = vmul.f32 %v300, %v292
        %v302 = vmul.f32 %v300, %v293
        %v303 = vlaneseq
        %v304 = vshrl.u32 %v303, 7
        %v305 = vsub.s32 0, %v304
        %v306 = vrot.slane %v301, %v305
        %v307 = vlaneseq
        %v308 = vshrl.u32 %v307, 7
        %v309 = vsub.s32 0, %v308
        %v310 = vrot.slane %v302, %v309
        %v311 = vmul.f32 %v306, %v292
        %v312 = vmul.f32 %v310, %v293
        %v313 = vmul.f32 %v306, %v294
        %v314 = vmul.f32 %v310, %v295
        %v315 = vmax.f32 %v311, %v313
        %v316 = vrot.slane %v315, 4
        %v317 = vmax.f32 %v315, %v316
        %v318 = vrot.slane %v317, 2
        %v319 = vmax.f32 %v317, %v318
        %v320 = vrot.slane %v319, 1
        %v321 = vmax.f32 %v319, %v320
        %v322 = vmax.f32 %v312, %v314
        %v323 = vrot.slane %v322, 4
        %v324 = vmax.f32 %v322, %v323
        %v325 = vrot.slane %v324, 2
        %v326 = vmax.f32 %v324, %v325
        %v327 = vrot.slane %v326, 1
        %v328 = vmax.f32 %v326, %v327
        %v329 = vsub.f32 %v311, %v321
        %v330 = vsub.f32 %v312, %v328
        %v331 = vsub.f32 %v313, %v321
        %v332 = vsub.f32 %v314, %v328
        %v333 = vmul.f32 %v329, 1.442695
        %v334 = vpow.pop %v333
        %v335 = vmul.f32 %v330, 1.442695
        %v336 = vpow.pop %v335
        %v337 = vmul.f32 %v331, 1.442695
        %v338 = vpow.pop %v337
        %v339 = vmul.f32 %v332, 1.442695
        %v340 = vpow.pop %v339
        %v341 = vadd.f32 %v334, %v338
        %v342 = vrot.slane %v341, 4
        %v343 = vadd.f32 %v341, %v342
        %v344 = vrot.slane %v343, 2
        %v345 = vadd.f32 %v343, %v344
        %v346 = vrot.slane %v345, 1
        %v347 = vadd.f32 %v345, %v346
        %v348 = vadd.f32 %v336, %v340
        %v349 = vrot.slane %v348, 4
        %v350 = vadd.f32 %v348, %v349
        %v351 = vrot.slane %v350, 2
        %v352 = vadd.f32 %v350, %v351
        %v353 = vrot.slane %v352, 1
        %v354 = vadd.f32 %v352, %v353
        %v355 = vrcp.pop %v347
        %v356 = vrcp.pop %v354
        %v357 = vmul.f32 %v292, %v355
        %v358 = vmul.f32 %v293, %v356
        %v359 = vlaneseq
        %v360 = vshrl.u32 %v359, 7
        %v361 = vsub.s32 0, %v360
        %v362 = vrot.slane %v357, %v361
        %v363 = vlaneseq
        %v364 = vshrl.u32 %v363, 7
        %v365 = vsub.s32 0, %v364
        %v366 = vrot.slane %v358, %v365
        %v367 = vmul.f32 %v362, %v334
        %v368 = vmul.f32 %v366, %v336
        %v369 = vmul.f32 %v362, %v338
        %v370 = vmul.f32 %v366, %v340
        %v371 = vadd.f32 %v367, 0.0
        %v372 = vadd.f32 %v368, 0.0
        %v373 = vadd.f32 %v369, 0.0
        %v374 = vadd.f32 %v370, 0.0
        %v375 = vlaneseq
        %v376 = vshrl.u32 %v375, 7
        %v377 = vsub.s32 1, %v376
        %v378 = vrot.slane %v301, %v377
        %v379 = vlaneseq
        %v380 = vshrl.u32 %v379, 7
        %v381 = vsub.s32 1, %v380
        %v382 = vrot.slane %v302, %v381
        %v383 = vmul.f32 %v378, %v292
        %v384 = vmul.f32 %v382, %v293
        %v385 = vmul.f32 %v378, %v294
        %v386 = vmul.f32 %v382, %v295
        %v387 = vmax.f32 %v383, %v385
        %v388 = vrot.slane %v387, 4
        %v389 = vmax.f32 %v387, %v388
        %v390 = vrot.slane %v389, 2
        %v391 = vmax.f32 %v389, %v390
        %v392 = vrot.slane %v391, 1
        %v393 = vmax.f32 %v391, %v392
        %v394 = vmax.f32 %v384, %v386
        %v395 = vrot.slane %v394, 4
        %v396 = vmax.f32 %v394, %v395
        %v397 = vrot.slane %v396, 2
        %v398 = vmax.f32 %v396, %v397
        %v399 = vrot.slane %v398, 1
        %v400 = vmax.f32 %v398, %v399
        %v401 = vsub.f32 %v383, %v393
        %v402 = vsub.f32 %v384, %v400
        %v403 = vsub.f32 %v385, %v393
        %v404 = vsub.f32 %v386, %v400
        %v405 = vmul.f32 %v401, 1.442695
        %v406 = vpow.pop %v405
        %v407 = vmul.f32 %v402, 1.442695
        %v408 = vpow.pop %v407
        %v409 = vmul.f32 %v403, 1.442695
        %v410 = vpow.pop %v409
        %v411 = vmul.f32 %v404, 1.442695
        %v412 = vpow.pop %v411
        %v413 = vadd.f32 %v406, %v410
        %v414 = vrot.slane %v413, 4
        %v415 = vadd.f32 %v413, %v414
        %v416 = vrot.slane %v415, 2
        %v417 = vadd.f32 %v415, %v416
        %v418 = vrot.slane %v417, 1
        %v419 = vadd.f32 %v417, %v418
        %v420 = vadd.f32 %v408, %v412
        %v421 = vrot.slane %v420, 4
        %v422 = vadd.f32 %v420, %v421
        %v423 = vrot.slane %v422, 2
        %v424 = vadd.f32 %v422, %v423
        %v425 = vrot.slane %v424, 1
        %v426 = vadd.f32 %v424, %v425
        %v427 = vrcp.pop %v419
        %v428 = vrcp.pop %v426
        %v429 = vmul.f32 %v292, %v427
        %v430 = vmul.f32 %v293, %v428
        %v431 = vlaneseq
        %v432 = vshrl.u32 %v431, 7
        %v433 = vsub.s32 1, %v432
        %v434 = vrot.slane %v429, %v433
        %v435 = vlaneseq
        %v436 = vshrl.u32 %v435, 7
        %v437 = vsub.s32 1, %v436
        %v438 = vrot.slane %v430, %v437
        %v439 = vmul.f32 %v434, %v406
        %v440 = vmul.f32 %v438, %v408
        %v441 = vmul.f32 %v434, %v410
        %v442 = vmul.f32 %v438, %v412
        %v443 = vadd.f32 %v371, %v439
        %v444 = vadd.f32 %v372, %v440
        %v445 = vadd.f32 %v373, %v441
        %v446 = vadd.f32 %v374, %v442
        %v447 = vlaneseq
        %v448 = vshrl.u32 %v447, 7
        %v449 = vsub.s32 2, %v448
        %v450 = vrot.slane %v301, %v449
        %v451 = vlaneseq
        %v452 = vshrl.u32 %v451, 7
        %v453 = vsub.s32 2, %v452
        %v454 = vrot.slane %v302, %v453
        %v455 = vmul.f32 %v450, %v292
        %v456 = vmul.f32 %v454, %v293
        %v457 = vmul.f32 %v450, %v294
        %v458 = vmul.f32 %v454, %v295
        %v459 = vmax.f32 %v455, %v457
        %v460 = vrot.slane %v459, 4
        %v461 = vmax.f32 %v459, %v460
        %v462 = vrot.slane %v461, 2
        %v463 = vmax.f32 %v461, %v462
        %v464 = vrot.slane %v463, 1
        %v465 = vmax.f32 %v463, %v464
        %v466 = vmax.f32 %v456, %v458
        %v467 = vrot.slane %v466, 4
        %v468 = vmax.f32 %v466, %v467
        %v469 = vrot.slane %v468, 2
        %v470 = vmax.f32 %v468, %v469
        %v471 = vrot.slane %v470, 1
        %v472 = vmax.f32 %v470, %v471
        %v473 = vsub.f32 %v455, %v465
        %v474 = vsub.f32 %v456, %v472
        %v475 = vsub.f32 %v457, %v465
        %v476 = vsub.f32 %v458, %v472
        %v477 = vmul.f32 %v473, 1.442695
        %v478 = vpow.pop %v477
        %v479 = vmul.f32 %v474, 1.442695
        %v480 = vpow.pop %v479
        %v481 = vmul.f32 %v475, 1.442695
        %v482 = vpow.pop %v481
        %v483 = vmul.f32 %v476, 1.442695
        %v484 = vpow.pop %v483
        %v485 = vadd.f32 %v478, %v482
        %v486 = vrot.slane %v485, 4
        %v487 = vadd.f32 %v485, %v486
        %v488 = vrot.slane %v487, 2
        %v489 = vadd.f32 %v487, %v488
        %v490 = vrot.slane %v489, 1
        %v491 = vadd.f32 %v489, %v490
        %v492 = vadd.f32 %v480, %v484
        %v493 = vrot.slane %v492, 4
        %v494 = vadd.f32 %v492, %v493
        %v495 = vrot.slane %v494, 2
        %v496 = vadd.f32 %v494, %v495
        %v497 = vrot.slane %v496, 1
        %v498 = vadd.f32 %v496, %v497
        %v499 = vrcp.pop %v491
        %v500 = vrcp.pop %v498
        %v501 = vmul.f32 %v292, %v499
        %v502 = vmul.f32 %v293, %v500
        %v503 = vlaneseq
        %v504 = vshrl.u32 %v503, 7
        %v505 = vsub.s32 2, %v504
        %v506 = vrot.slane %v501, %v505
        %v507 = vlaneseq
        %v508 = vshrl.u32 %v507, 7
        %v509 = vsub.s32 2, %v508
        %v510 = vrot.slane %v502, %v509
        %v511 = vmul.f32 %v506, %v478
        %v512 = vmul.f32 %v510, %v480
        %v513 = vmul.f32 %v506, %v482
        %v514 = vmul.f32 %v510, %v484
        %v515 = vadd.f32 %v443, %v511
        %v516 = vadd.f32 %v444, %v512
        %v517 = vadd.f32 %v445, %v513
        %v518 = vadd.f32 %v446, %v514
        %v519 = vlaneseq
        %v520 = vshrl.u32 %v519, 7
        %v521 = vsub.s32 3, %v520
        %v522 = vrot.slane %v301, %v521
        %v523 = vlaneseq
        %v524 = vshrl.u32 %v523, 7
        %v525 = vsub.s32 3, %v524
        %v526 = vrot.slane %v302, %v525
        %v527 = vmul.f32 %v522, %v292
        %v528 = vmul.f32 %v526, %v293
        %v529 = vmul.f32 %v522, %v294
        %v530 = vmul.f32 %v526, %v295
        %v531 = vmax.f32 %v527, %v529
        %v532 = vrot.slane %v531, 4
        %v533 = vmax.f32 %v531, %v532
        %v534 = vrot.slane %v533, 2
        %v535 = vmax.f32 %v533, %v534
        %v536 = vrot.slane %v535, 1
        %v537 = vmax.f32 %v535, %v536
        %v538 = vmax.f32 %v528, %v530
        %v539 = vrot.slane %v538, 4
        %v540 = vmax.f32 %v538, %v539
        %v541 = vrot.slane %v540, 2
        %v542 = vmax.f32 %v540, %v541
        %v543 = vrot.slane %v542, 1
        %v544 = vmax.f32 %v542, %v543
        %v545 = vsub.f32 %v527, %v537
        %v546 = vsub.f32 %v528, %v544
        %v547 = vsub.f32 %v529, %v537
        %v548 = vsub.f32 %v530, %v544
        %v549 = vmul.f32 %v545, 1.442695
        %v550 = vpow.pop %v549
        %v551 = vmul.f32 %v546, 1.442695
        %v552 = vpow.pop %v551
        %v553 = vmul.f32 %v547, 1.442695
        %v554 = vpow.pop %v553
        %v555 = vmul.f32 %v548, 1.442695
        %v556 = vpow.pop %v555
        %v557 = vadd.f32 %v550, %v554
        %v558 = vrot.slane %v557, 4
        %v559 = vadd.f32 %v557, %v558
        %v560 = vrot.slane %v559, 2
        %v561 = vadd.f32 %v559, %v560
        %v562 = vrot.slane %v561, 1
        %v563 = vadd.f32 %v561, %v562
        %v564 = vadd.f32 %v552, %v556
        %v565 = vrot.slane %v564, 4
        %v566 = vadd.f32 %v564, %v565
        %v567 = vrot.slane %v566, 2
        %v568 = vadd.f32 %v566, %v567
        %v569 = vrot.slane %v568, 1
        %v570 = vadd.f32 %v568, %v569
        %v571 = vrcp.pop %v563
        %v572 = vrcp.pop %v570
        %v573 = vmul.f32 %v292, %v571
        %v574 = vmul.f32 %v293, %v572
        %v575 = vlaneseq
        %v576 = vshrl.u32 %v575, 7
        %v577 = vsub.s32 3, %v576
        %v578 = vrot.slane %v573, %v577
        %v579 = vlaneseq
        %v580 = vshrl.u32 %v579, 7
        %v581 = vsub.s32 3, %v580
        %v582 = vrot.slane %v574, %v581
        %v583 = vmul.f32 %v578, %v550
        %v584 = vmul.f32 %v582, %v552
        %v585 = vmul.f32 %v578, %v554
        %v586 = vmul.f32 %v582, %v556
        %v587 = vadd.f32 %v515, %v583
        %v588 = vadd.f32 %v516, %v584
        %v589 = vadd.f32 %v517, %v585
        %v590 = vadd.f32 %v518, %v586
        %v591 = vlaneseq
        %v592 = vshrl.u32 %v591, 7
        %v593 = vsub.s32 4, %v592
        %v594 = vrot.slane %v301, %v593
        %v595 = vlaneseq
        %v596 = vshrl.u32 %v595, 7
        %v597 = vsub.s32 4, %v596
        %v598 = vrot.slane %v302, %v597
        %v599 = vmul.f32 %v594, %v292
        %v600 = vmul.f32 %v598, %v293
        %v601 = vmul.f32 %v594, %v294
        %v602 = vmul.f32 %v598, %v295
        %v603 = vmax.f32 %v599, %v601
        %v604 = vrot.slane %v603, 4
        %v605 = vmax.f32 %v603, %v604
        %v606 = vrot.slane %v605, 2
        %v607 = vmax.f32 %v605, %v606
        %v608 = vrot.slane %v607, 1
        %v609 = vmax.f32 %v607, %v608
        %v610 = vmax.f32 %v600, %v602
        %v611 = vrot.slane %v610, 4
        %v612 = vmax.f32 %v610, %v611
        %v613 = vrot.slane %v612, 2
        %v614 = vmax.f32 %v612, %v613
        %v615 = vrot.slane %v614, 1
        %v616 = vmax.f32 %v614, %v615
        %v617 = vsub.f32 %v599, %v609
        %v618 = vsub.f32 %v600, %v616
        %v619 = vsub.f32 %v601, %v609
        %v620 = vsub.f32 %v602, %v616
        %v621 = vmul.f32 %v617, 1.442695
        %v622 = vpow.pop %v621
        %v623 = vmul.f32 %v618, 1.442695
        %v624 = vpow.pop %v623
        %v625 = vmul.f32 %v619, 1.442695
        %v626 = vpow.pop %v625
        %v627 = vmul.f32 %v620, 1.442695
        %v628 = vpow.pop %v627
        %v629 = vadd.f32 %v622, %v626
        %v630 = vrot.slane %v629, 4
        %v631 = vadd.f32 %v629, %v630
        %v632 = vrot.slane %v631, 2
        %v633 = vadd.f32 %v631, %v632
        %v634 = vrot.slane %v633, 1
        %v635 = vadd.f32 %v633, %v634
        %v636 = vadd.f32 %v624, %v628
        %v637 = vrot.slane %v636, 4
        %v638 = vadd.f32 %v636, %v637
        %v639 = vrot.slane %v638, 2
        %v640 = vadd.f32 %v638, %v639
        %v641 = vrot.slane %v640, 1
        %v642 = vadd.f32 %v640, %v641
        %v643 = vrcp.pop %v635
        %v644 = vrcp.pop %v642
        %v645 = vmul.f32 %v292, %v643
        %v646 = vmul.f32 %v293, %v644
        %v647 = vlaneseq
        %v648 = vshrl.u32 %v647, 7
        %v649 = vsub.s32 4, %v648
        %v650 = vrot.slane %v645, %v649
        %v651 = vlaneseq
        %v652 = vshrl.u32 %v651, 7
        %v653 = vsub.s32 4, %v652
        %v654 = vrot.slane %v646, %v653
        %v655 = vmul.f32 %v650, %v622
        %v656 = vmul.f32 %v654, %v624
        %v657 = vmul.f32 %v650, %v626
        %v658 = vmul.f32 %v654, %v628
        %v659 = vadd.f32 %v587, %v655
        %v660 = vadd.f32 %v588, %v656
        %v661 = vadd.f32 %v589, %v657
        %v662 = vadd.f32 %v590, %v658
        %v663 = vlaneseq
        %v664 = vshrl.u32 %v663, 7
        %v665 = vsub.s32 5, %v664
        %v666 = vrot.slane %v301, %v665
        %v667 = vlaneseq
        %v668 = vshrl.u32 %v667, 7
        %v669 = vsub.s32 5, %v668
        %v670 = vrot.slane %v302, %v669
        %v671 = vmul.f32 %v666, %v292
        %v672 = vmul.f32 %v670, %v293
        %v673 = vmul.f32 %v666, %v294
        %v674 = vmul.f32 %v670, %v295
        %v675 = vmax.f32 %v671, %v673
        %v676 = vrot.slane %v675, 4
        %v677 = vmax.f32 %v675, %v676
        %v678 = vrot.slane %v677, 2
        %v679 = vmax.f32 %v677, %v678
        %v680 = vrot.slane %v679, 1
        %v681 = vmax.f32 %v679, %v680
        %v682 = vmax.f32 %v672, %v674
        %v683 = vrot.slane %v682, 4
        %v684 = vmax.f32 %v682, %v683
        %v685 = vrot.slane %v684, 2
        %v686 = vmax.f32 %v684, %v685
        %v687 = vrot.slane %v686, 1
        %v688 = vmax.f32 %v686, %v687
        %v689 = vsub.f32 %v671, %v681
        %v690 = vsub.f32 %v672, %v688
        %v691 = vsub.f32 %v673, %v681
        %v692 = vsub.f32 %v674, %v688
        %v693 = vmul.f32 %v689, 1.442695
        %v694 = vpow.pop %v693
        %v695 = vmul.f32 %v690, 1.442695
        %v696 = vpow.pop %v695
        %v697 = vmul.f32 %v691, 1.442695
        %v698 = vpow.pop %v697
        %v699 = vmul.f32 %v692, 1.442695
        %v700 = vpow.pop %v699
        %v701 = vadd.f32 %v694, %v698
        %v702 = vrot.slane %v701, 4
        %v703 = vadd.f32 %v701, %v702
        %v704 = vrot.slane %v703, 2
        %v705 = vadd.f32 %v703, %v704
        %v706 = vrot.slane %v705, 1
        %v707 = vadd.f32 %v705, %v706
        %v708 = vadd.f32 %v696, %v700
        %v709 = vrot.slane %v708, 4
        %v710 = vadd.f32 %v708, %v709
        %v711 = vrot.slane %v710, 2
        %v712 = vadd.f32 %v710, %v711
        %v713 = vrot.slane %v712, 1
        %v714 = vadd.f32 %v712, %v713
        %v715 = vrcp.pop %v707
        %v716 = vrcp.pop %v714
        %v717 = vmul.f32 %v292, %v715
        %v718 = vmul.f32 %v293, %v716
        %v719 = vlaneseq
        %v720 = vshrl.u32 %v719, 7
        %v721 = vsub.s32 5, %v720
        %v722 = vrot.slane %v717, %v721
        %v723 = vlaneseq
        %v724 = vshrl.u32 %v723, 7
        %v725 = vsub.s32 5, %v724
        %v726 = vrot.slane %v718, %v725
        %v727 = vmul.f32 %v722, %v694
        %v728 = vmul.f32 %v726, %v696
        %v729 = vmul.f32 %v722, %v698
        %v730 = vmul.f32 %v726, %v700
        %v731 = vadd.f32 %v659, %v727
        %v732 = vadd.f32 %v660, %v728
        %v733 = vadd.f32 %v661, %v729
        %v734 = vadd.f32 %v662, %v730
        %v735 = vlaneseq
        %v736 = vshrl.u32 %v735, 7
        %v737 = vsub.s32 6, %v736
        %v738 = vrot.slane %v301, %v737
        %v739 = vlaneseq
        %v740 = vshrl.u32 %v739, 7
        %v741 = vsub.s32 6, %v740
        %v742 = vrot.slane %v302, %v741
        %v743 = vmul.f32 %v738, %v292
        %v744 = vmul.f32 %v742, %v293
        %v745 = vmul.f32 %v738, %v294
        %v746 = vmul.f32 %v742, %v295
        %v747 = vmax.f32 %v743, %v745
        %v748 = vrot.slane %v747, 4
        %v749 = vmax.f32 %v747, %v748
        %v750 = vrot.slane %v749, 2
        %v751 = vmax.f32 %v749, %v750
        %v752 = vrot.slane %v751, 1
        %v753 = vmax.f32 %v751, %v752
        %v754 = vmax.f32 %v744, %v746
        %v755 = vrot.slane %v754, 4
        %v756 = vmax.f32 %v754, %v755
        %v757 = vrot.slane %v756, 2
        %v758 = vmax.f32 %v756, %v757
        %v759 = vrot.slane %v758, 1
        %v760 = vmax.f32 %v758, %v759
        %v761 = vsub.f32 %v743, %v753
        %v762 = vsub.f32 %v744, %v760
        %v763 = vsub.f32 %v745, %v753
        %v764 = vsub.f32 %v746, %v760
        %v765 = vmul.f32 %v761, 1.442695
        %v766 = vpow.pop %v765
        %v767 = vmul.f32 %v762, 1.442695
        %v768 = vpow.pop %v767
        %v769 = vmul.f32 %v763, 1.442695
        %v770 = vpow.pop %v769
        %v771 = vmul.f32 %v764, 1.442695
        %v772 = vpow.pop %v771
        %v773 = vadd.f32 %v766, %v770
        %v774 = vrot.slane %v773, 4
        %v775 = vadd.f32 %v773, %v774
        %v776 = vrot.slane %v775, 2
        %v777 = vadd.f32 %v775, %v776
        %v778 = vrot.slane %v777, 1
        %v779 = vadd.f32 %v777, %v778
        %v780 = vadd.f32 %v768, %v772
        %v781 = vrot.slane %v780, 4
        %v782 = vadd.f32 %v780, %v781
        %v783 = vrot.slane %v782, 2
        %v784 = vadd.f32 %v782, %v783
        %v785 = vrot.slane %v784, 1
        %v786 = vadd.f32 %v784, %v785
        %v787 = vrcp.pop %v779
        %v788 = vrcp.pop %v786
        %v789 = vmul.f32 %v292, %v787
        %v790 = vmul.f32 %v293, %v788
        %v791 = vlaneseq
        %v792 = vshrl.u32 %v791, 7
        %v793 = vsub.s32 6, %v792
        %v794 = vrot.slane %v789, %v793
        %v795 = vlaneseq
        %v796 = vshrl.u32 %v795, 7
        %v797 = vsub.s32 6, %v796
        %v798 = vrot.slane %v790, %v797
        %v799 = vmul.f32 %v794, %v766
        %v800 = vmul.f32 %v798, %v768
        %v801 = vmul.f32 %v794, %v770
        %v802 = vmul.f32 %v798, %v772
        %v803 = vadd.f32 %v731, %v799
        %v804 = vadd.f32 %v732, %v800
        %v805 = vadd.f32 %v733, %v801
        %v806 = vadd.f32 %v734, %v802
        %v807 = vlaneseq
        %v808 = vshrl.u32 %v807, 7
        %v809 = vsub.s32 7, %v808
        %v810 = vrot.slane %v301, %v809
        %v811 = vlaneseq
        %v812 = vshrl.u32 %v811, 7
        %v813 = vsub.s32 7, %v812
        %v814 = vrot.slane %v302, %v813
        %v815 = vmul.f32 %v810, %v292
        %v816 = vmul.f32 %v814, %v293
        %v817 = vmul.f32 %v810, %v294
        %v818 = vmul.f32 %v814, %v295
        %v819 = vmax.f32 %v815, %v817
        %v820 = vrot.slane %v819, 4
        %v821 = vmax.f32 %v819, %v820
        %v822 = vrot.slane %v821, 2
        %v823 = vmax.f32 %v821, %v822
        %v824 = vrot.slane %v823, 1
        %v825 = vmax.f32 %v823, %v824
        %v826 = vmax.f32 %v816, %v818
        %v827 = vrot.slane %v826, 4
        %v828 = vmax.f32 %v826, %v827
        %v829 = vrot.slane %v828, 2
        %v830 = vmax.f32 %v828, %v829
        %v831 = vrot.slane %v830, 1
        %v832 = vmax.f32 %v830, %v831
        %v833 = vsub.f32 %v815, %v825
        %v834 = vsub.f32 %v816, %v832
        %v835 = vsub.f32 %v817, %v825
        %v836 = vsub.f32 %v818, %v832
        %v837 = vmul.f32 %v833, 1.442695
        %v838 = vpow.pop %v837
        %v839 = vmul.f32 %v834, 1.442695
        %v840 = vpow.pop %v839
        %v841 = vmul.f32 %v835, 1.442695
        %v842 = vpow.pop %v841
        %v843 = vmul.f32 %v836, 1.442695
        %v844 = vpow.pop %v843
        %v845 = vadd.f32 %v838, %v842
        %v846 = vrot.slane %v845, 4
        %v847 = vadd.f32 %v845, %v846
        %v848 = vrot.slane %v847, 2
        %v849 = vadd.f32 %v847, %v848
        %v850 = vrot.slane %v849, 1
        %v851 = vadd.f32 %v849, %v850
        %v852 = vadd.f32 %v840, %v844
        %v853 = vrot.slane %v852, 4
        %v854 = vadd.f32 %v852, %v853
        %v855 = vrot.slane %v854, 2
        %v856 = vadd.f32 %v854, %v855
        %v857 = vrot.slane %v856, 1
        %v858 = vadd.f32 %v856, %v857
        %v859 = vrcp.pop %v851
        %v860 = vrcp.pop %v858
        %v861 = vmul.f32 %v292, %v859
        %v862 = vmul.f32 %v293, %v860
        %v863 = vlaneseq
        %v864 = vshrl.u32 %v863, 7
        %v865 = vsub.s32 7, %v864
        %v866 = vrot.slane %v861, %v865
        %v867 = vlaneseq
        %v868 = vshrl.u32 %v867, 7
        %v869 = vsub.s32 7, %v868
        %v870 = vrot.slane %v862, %v869
        %v871 = vmul.f32 %v866, %v838
        %v872 = vmul.f32 %v870, %v840
        %v873 = vmul.f32 %v866, %v842
        %v874 = vmul.f32 %v870, %v844
        %v875 = vadd.f32 %v803, %v871
        %v876 = vadd.f32 %v804, %v872
        %v877 = vadd.f32 %v805, %v873
        %v878 = vadd.f32 %v806, %v874
        %v879 = vmul.f32 %v300, %v294
        %v880 = vmul.f32 %v300, %v295
        %v881 = vlaneseq
        %v882 = vshrl.u32 %v881, 7
        %v883 = vsub.s32 0, %v882
        %v884 = vrot.slane %v879, %v883
        %v885 = vlaneseq
        %v886 = vshrl.u32 %v885, 7
        %v887 = vsub.s32 0, %v886
        %v888 = vrot.slane %v880, %v887
        %v889 = vmul.f32 %v884, %v292
        %v890 = vmul.f32 %v888, %v293
        %v891 = vmul.f32 %v884, %v294
        %v892 = vmul.f32 %v888, %v295
        %v893 = vmax.f32 %v889, %v891
        %v894 = vrot.slane %v893, 4
        %v895 = vmax.f32 %v893, %v894
        %v896 = vrot.slane %v895, 2
        %v897 = vmax.f32 %v895, %v896
        %v898 = vrot.slane %v897, 1
        %v899 = vmax.f32 %v897, %v898
        %v900 = vmax.f32 %v890, %v892
        %v901 = vrot.slane %v900, 4
        %v902 = vmax.f32 %v900, %v901
        %v903 = vrot.slane %v902, 2
        %v904 = vmax.f32 %v902, %v903
        %v905 = vrot.slane %v904, 1
        %v906 = vmax.f32 %v904, %v905
        %v907 = vsub.f32 %v889, %v899
        %v908 = vsub.f32 %v890, %v906
        %v909 = vsub.f32 %v891, %v899
        %v910 = vsub.f32 %v892, %v906
        %v911 = vmul.f32 %v907, 1.442695
        %v912 = vpow.pop %v911
        %v913 = vmul.f32 %v908, 1.442695
        %v914 = vpow.pop %v913
        %v915 = vmul.f32 %v909, 1.442695
        %v916 = vpow.pop %v915
        %v917 = vmul.f32 %v910, 1.442695
        %v918 = vpow.pop %v917
        %v919 = vadd.f32 %v912, %v916
        %v920 = vrot.slane %v919, 4
        %v921 = vadd.f32 %v919, %v920
        %v922 = vrot.slane %v921, 2
        %v923 = vadd.f32 %v921, %v922
        %v924 = vrot.slane %v923, 1
        %v925 = vadd.f32 %v923, %v924
        %v926 = vadd.f32 %v914, %v918
        %v927 = vrot.slane %v926, 4
        %v928 = vadd.f32 %v926, %v927
        %v929 = vrot.slane %v928, 2
        %v930 = vadd.f32 %v928, %v929
        %v931 = vrot.slane %v930, 1
        %v932 = vadd.f32 %v930, %v931
        %v933 = vrcp.pop %v925
        %v934 = vrcp.pop %v932
        %v935 = vmul.f32 %v294, %v933
        %v936 = vmul.f32 %v295, %v934
        %v937 = vlaneseq
        %v938 = vshrl.u32 %v937, 7
        %v939 = vsub.s32 0, %v938
        %v940 = vrot.slane %v935, %v939
        %v941 = vlaneseq
        %v942 = vshrl.u32 %v941, 7
        %v943 = vsub.s32 0, %v942
        %v944 = vrot.slane %v936, %v943
        %v945 = vmul.f32 %v940, %v912
        %v946 = vmul.f32 %v944, %v914
        %v947 = vmul.f32 %v940, %v916
        %v948 = vmul.f32 %v944, %v918
        %v949 = vadd.f32 %v875, %v945
        %v950 = vadd.f32 %v876, %v946
        %v951 = vadd.f32 %v877, %v947
        %v952 = vadd.f32 %v878, %v948
        %v953 = vlaneseq
        %v954 = vshrl.u32 %v953, 7
        %v955 = vsub.s32 1, %v954
        %v956 = vrot.slane %v879, %v955
        %v957 = vlaneseq
        %v958 = vshrl.u32 %v957, 7
        %v959 = vsub.s32 1, %v958
        %v960 = vrot.slane %v880, %v959
        %v961 = vmul.f32 %v956, %v292
        %v962 = vmul.f32 %v960, %v293
        %v963 = vmul.f32 %v956, %v294
        %v964 = vmul.f32 %v960, %v295
        %v965 = vmax.f32 %v961, %v963
        %v966 = vrot.slane %v965, 4
        %v967 = vmax.f32 %v965, %v966
        %v968 = vrot.slane %v967, 2
        %v969 = vmax.f32 %v967, %v968
        %v970 = vrot.slane %v969, 1
        %v971 = vmax.f32 %v969, %v970
        %v972 = vmax.f32 %v962, %v964
        %v973 = vrot.slane %v972, 4
        %v974 = vmax.f32 %v972, %v973
        %v975 = vrot.slane %v974, 2
        %v976 = vmax.f32 %v974, %v975
        %v977 = vrot.slane %v976, 1
        %v978 = vmax.f32 %v976, %v977
        %v979 = vsub.f32 %v961, %v971
        %v980 = vsub.f32 %v962, %v978
        %v981 = vsub.f32 %v963, %v971
        %v982 = vsub.f32 %v964, %v978
        %v983 = vmul.f32 %v979, 1.442695
        %v984 = vpow.pop %v983
        %v985 = vmul.f32 %v980, 1.442695
        %v986 = vpow.pop %v985
        %v987 = vmul.f32 %v981, 1.442695
        %v988 = vpow.pop %v987
        %v989 = vmul.f32 %v982, 1.442695
        %v990 = vpow.pop %v989
        %v991 = vadd.f32 %v984, %v988
        %v992 = vrot.slane %v991, 4
        %v993 = vadd.f32 %v991, %v992
        %v994 = vrot.slane %v993, 2
        %v995 = vadd.f32 %v993, %v994
        %v996 = vrot.slane %v995, 1
        %v997 = vadd.f32 %v995, %v996
        %v998 = vadd.f32 %v986, %v990
        %v999 = vrot.slane %v998, 4
        %v1000 = vadd.f32 %v998, %v999
        %v1001 = vrot.slane %v1000, 2
        %v1002 = vadd.f32 %v1000, %v1001
        %v1003 = vrot.slane %v1002, 1
        %v1004 = vadd.f32 %v1002, %v1003
        %v1005 = vrcp.pop %v997
        %v1006 = vrcp.pop %v1004
        %v1007 = vmul.f32 %v294, %v1005
        %v1008 = vmul.f32 %v295, %v1006
        %v1009 = vlaneseq
        %v1010 = vshrl.u32 %v1009, 7
        %v1011 = vsub.s32 1, %v1010
        %v1012 = vrot.slane %v1007, %v1011
        %v1013 = vlaneseq
        %v1014 = vshrl.u32 %v1013, 7
        %v1015 = vsub.s32 1, %v1014
        %v1016 = vrot.slane %v1008, %v1015
        %v1017 = vmul.f32 %v1012, %v984
        %v1018 = vmul.f32 %v1016, %v986
        %v1019 = vmul.f32 %v1012, %v988
        %v1020 = vmul.f32 %v1016, %v990
        %v1021 = vadd.f32 %v949, %v1017
        %v1022 = vadd.f32 %v950, %v1018
        %v1023 = vadd.f32 %v951, %v1019
        %v1024 = vadd.f32 %v952, %v1020
        %v1025 = vlaneseq
        %v1026 = vshrl.u32 %v1025, 7
        %v1027 = vsub.s32 2, %v1026
        %v1028 = vrot.slane %v879, %v1027
        %v1029 = vlaneseq
        %v1030 = vshrl.u32 %v1029, 7
        %v1031 = vsub.s32 2, %v1030
        %v1032 = vrot.slane %v880, %v1031
        %v1033 = vmul.f32 %v1028, %v292
        %v1034 = vmul.f32 %v1032, %v293
        %v1035 = vmul.f32 %v1028, %v294
        %v1036 = vmul.f32 %v1032, %v295
        %v1037 = vmax.f32 %v1033, %v1035
        %v1038 = vrot.slane %v1037, 4
        %v1039 = vmax.f32 %v1037, %v1038
        %v1040 = vrot.slane %v1039, 2
        %v1041 = vmax.f32 %v1039, %v1040
        %v1042 = vrot.slane %v1041, 1
        %v1043 = vmax.f32 %v1041, %v1042
        %v1044 = vmax.f32 %v1034, %v1036
        %v1045 = vrot.slane %v1044, 4
        %v1046 = vmax.f32 %v1044, %v1045
        %v1047 = vrot.slane %v1046, 2
        %v1048 = vmax.f32 %v1046, %v1047
        %v1049 = vrot.slane %v1048, 1
        %v1050 = vmax.f32 %v1048, %v1049
        %v1051 = vsub.f32 %v1033, %v1043
        %v1052 = vsub.f32 %v1034, %v1050
        %v1053 = vsub.f32 %v1035, %v1043
        %v1054 = vsub.f32 %v1036, %v1050
        %v1055 = vmul.f32 %v1051, 1.442695
        %v1056 = vpow.pop %v1055
        %v1057 = vmul.f32 %v1052, 1.442695
        %v1058 = vpow.pop %v1057
        %v1059 = vmul.f32 %v1053, 1.442695
        %v1060 = vpow.pop %v1059
        %v1061 = vmul.f32 %v1054, 1.442695
        %v1062 = vpow.pop %v1061
        %v1063 = vadd.f32 %v1056, %v1060
        %v1064 = vrot.slane %v1063, 4
        %v1065 = vadd.f32 %v1063, %v1064
        %v1066 = vrot.slane %v1065, 2
        %v1067 = vadd.f32 %v1065, %v1066
        %v1068 = vrot.slane %v1067, 1
        %v1069 = vadd.f32 %v1067, %v1068
        %v1070 = vadd.f32 %v1058, %v1062
        %v1071 = vrot.slane %v1070, 4
        %v1072 = vadd.f32 %v1070, %v1071
        %v1073 = vrot.slane %v1072, 2
        %v1074 = vadd.f32 %v1072, %v1073
        %v1075 = vrot.slane %v1074, 1
        %v1076 = vadd.f32 %v1074, %v1075
        %v1077 = vrcp.pop %v1069
        %v1078 = vrcp.pop %v1076
        %v1079 = vmul.f32 %v294, %v1077
        %v1080 = vmul.f32 %v295, %v1078
        %v1081 = vlaneseq
        %v1082 = vshrl.u32 %v1081, 7
        %v1083 = vsub.s32 2, %v1082
        %v1084 = vrot.slane %v1079, %v1083
        %v1085 = vlaneseq
        %v1086 = vshrl.u32 %v1085, 7
        %v1087 = vsub.s32 2, %v1086
        %v1088 = vrot.slane %v1080, %v1087
        %v1089 = vmul.f32 %v1084, %v1056
        %v1090 = vmul.f32 %v1088, %v1058
        %v1091 = vmul.f32 %v1084, %v1060
        %v1092 = vmul.f32 %v1088, %v1062
        %v1093 = vadd.f32 %v1021, %v1089
        %v1094 = vadd.f32 %v1022, %v1090
        %v1095 = vadd.f32 %v1023, %v1091
        %v1096 = vadd.f32 %v1024, %v1092
        %v1097 = vlaneseq
        %v1098 = vshrl.u32 %v1097, 7
        %v1099 = vsub.s32 3, %v1098
        %v1100 = vrot.slane %v879, %v1099
        %v1101 = vlaneseq
        %v1102 = vshrl.u32 %v1101, 7
        %v1103 = vsub.s32 3, %v1102
        %v1104 = vrot.slane %v880, %v1103
        %v1105 = vmul.f32 %v1100, %v292
        %v1106 = vmul.f32 %v1104, %v293
        %v1107 = vmul.f32 %v1100, %v294
        %v1108 = vmul.f32 %v1104, %v295
        %v1109 = vmax.f32 %v1105, %v1107
        %v1110 = vrot.slane %v1109, 4
        %v1111 = vmax.f32 %v1109, %v1110
        %v1112 = vrot.slane %v1111, 2
        %v1113 = vmax.f32 %v1111, %v1112
        %v1114 = vrot.slane %v1113, 1
        %v1115 = vmax.f32 %v1113, %v1114
        %v1116 = vmax.f32 %v1106, %v1108
        %v1117 = vrot.slane %v1116, 4
        %v1118 = vmax.f32 %v1116, %v1117
        %v1119 = vrot.slane %v1118, 2
        %v1120 = vmax.f32 %v1118, %v1119
        %v1121 = vrot.slane %v1120, 1
        %v1122 = vmax.f32 %v1120, %v1121
        %v1123 = vsub.f32 %v1105, %v1115
        %v1124 = vsub.f32 %v1106, %v1122
        %v1125 = vsub.f32 %v1107, %v1115
        %v1126 = vsub.f32 %v1108, %v1122
        %v1127 = vmul.f32 %v1123, 1.442695
        %v1128 = vpow.pop %v1127
        %v1129 = vmul.f32 %v1124, 1.442695
        %v1130 = vpow.pop %v1129
        %v1131 = vmul.f32 %v1125, 1.442695
        %v1132 = vpow.pop %v1131
        %v1133 = vmul.f32 %v1126, 1.442695
        %v1134 = vpow.pop %v1133
        %v1135 = vadd.f32 %v1128, %v1132
        %v1136 = vrot.slane %v1135, 4
        %v1137 = vadd.f32 %v1135, %v1136
        %v1138 = vrot.slane %v1137, 2
        %v1139 = vadd.f32 %v1137, %v1138
        %v1140 = vrot.slane %v1139, 1
        %v1141 = vadd.f32 %v1139, %v1140
        %v1142 = vadd.f32 %v1130, %v1134
        %v1143 = vrot.slane %v1142, 4
        %v1144 = vadd.f32 %v1142, %v1143
        %v1145 = vrot.slane %v1144, 2
        %v1146 = vadd.f32 %v1144, %v1145
        %v1147 = vrot.slane %v1146, 1
        %v1148 = vadd.f32 %v1146, %v1147
        %v1149 = vrcp.pop %v1141
        %v1150 = vrcp.pop %v1148
        %v1151 = vmul.f32 %v294, %v1149
        %v1152 = vmul.f32 %v295, %v1150
        %v1153 = vlaneseq
        %v1154 = vshrl.u32 %v1153, 7
        %v1155 = vsub.s32 3, %v1154
        %v1156 = vrot.slane %v1151, %v1155
        %v1157 = vlaneseq
        %v1158 = vshrl.u32 %v1157, 7
        %v1159 = vsub.s32 3, %v1158
        %v1160 = vrot.slane %v1152, %v1159
        %v1161 = vmul.f32 %v1156, %v1128
        %v1162 = vmul.f32 %v1160, %v1130
        %v1163 = vmul.f32 %v1156, %v1132
        %v1164 = vmul.f32 %v1160, %v1134
        %v1165 = vadd.f32 %v1093, %v1161
        %v1166 = vadd.f32 %v1094, %v1162
        %v1167 = vadd.f32 %v1095, %v1163
        %v1168 = vadd.f32 %v1096, %v1164
        %v1169 = vlaneseq
        %v1170 = vshrl.u32 %v1169, 7
        %v1171 = vsub.s32 4, %v1170
        %v1172 = vrot.slane %v879, %v1171
        %v1173 = vlaneseq
        %v1174 = vshrl.u32 %v1173, 7
        %v1175 = vsub.s32 4, %v1174
        %v1176 = vrot.slane %v880, %v1175
        %v1177 = vmul.f32 %v1172, %v292
        %v1178 = vmul.f32 %v1176, %v293
        %v1179 = vmul.f32 %v1172, %v294
        %v1180 = vmul.f32 %v1176, %v295
        %v1181 = vmax.f32 %v1177, %v1179
        %v1182 = vrot.slane %v1181, 4
        %v1183 = vmax.f32 %v1181, %v1182
        %v1184 = vrot.slane %v1183, 2
        %v1185 = vmax.f32 %v1183, %v1184
        %v1186 = vrot.slane %v1185, 1
        %v1187 = vmax.f32 %v1185, %v1186
        %v1188 = vmax.f32 %v1178, %v1180
        %v1189 = vrot.slane %v1188, 4
        %v1190 = vmax.f32 %v1188, %v1189
        %v1191 = vrot.slane %v1190, 2
        %v1192 = vmax.f32 %v1190, %v1191
        %v1193 = vrot.slane %v1192, 1
        %v1194 = vmax.f32 %v1192, %v1193
        %v1195 = vsub.f32 %v1177, %v1187
        %v1196 = vsub.f32 %v1178, %v1194
        %v1197 = vsub.f32 %v1179, %v1187
        %v1198 = vsub.f32 %v1180, %v1194
        %v1199 = vmul.f32 %v1195, 1.442695
        %v1200 = vpow.pop %v1199
        %v1201 = vmul.f32 %v1196, 1.442695
        %v1202 = vpow.pop %v1201
        %v1203 = vmul.f32 %v1197, 1.442695
        %v1204 = vpow.pop %v1203
        %v1205 = vmul.f32 %v1198, 1.442695
        %v1206 = vpow.pop %v1205
        %v1207 = vadd.f32 %v1200, %v1204
        %v1208 = vrot.slane %v1207, 4
        %v1209 = vadd.f32 %v1207, %v1208
        %v1210 = vrot.slane %v1209, 2
        %v1211 = vadd.f32 %v1209, %v1210
        %v1212 = vrot.slane %v1211, 1
        %v1213 = vadd.f32 %v1211, %v1212
        %v1214 = vadd.f32 %v1202, %v1206
        %v1215 = vrot.slane %v1214, 4
        %v1216 = vadd.f32 %v1214, %v1215
        %v1217 = vrot.slane %v1216, 2
        %v1218 = vadd.f32 %v1216, %v1217
        %v1219 = vrot.slane %v1218, 1
        %v1220 = vadd.f32 %v1218, %v1219
        %v1221 = vrcp.pop %v1213
        %v1222 = vrcp.pop %v1220
        %v1223 = vmul.f32 %v294, %v1221
        %v1224 = vmul.f32 %v295, %v1222
        %v1225 = vlaneseq
        %v1226 = vshrl.u32 %v1225, 7
        %v1227 = vsub.s32 4, %v1226
        %v1228 = vrot.slane %v1223, %v1227
        %v1229 = vlaneseq
        %v1230 = vshrl.u32 %v1229, 7
        %v1231 = vsub.s32 4, %v1230
        %v1232 = vrot.slane %v1224, %v1231
        %v1233 = vmul.f32 %v1228, %v1200
        %v1234 = vmul.f32 %v1232, %v1202
        %v1235 = vmul.f32 %v1228, %v1204
        %v1236 = vmul.f32 %v1232, %v1206
        %v1237 = vadd.f32 %v1165, %v1233
        %v1238 = vadd.f32 %v1166, %v1234
        %v1239 = vadd.f32 %v1167, %v1235
        %v1240 = vadd.f32 %v1168, %v1236
        %v1241 = vlaneseq
        %v1242 = vshrl.u32 %v1241, 7
        %v1243 = vsub.s32 5, %v1242
        %v1244 = vrot.slane %v879, %v1243
        %v1245 = vlaneseq
        %v1246 = vshrl.u32 %v1245, 7
        %v1247 = vsub.s32 5, %v1246
        %v1248 = vrot.slane %v880, %v1247
        %v1249 = vmul.f32 %v1244, %v292
        %v1250 = vmul.f32 %v1248, %v293
        %v1251 = vmul.f32 %v1244, %v294
        %v1252 = vmul.f32 %v1248, %v295
        %v1253 = vmax.f32 %v1249, %v1251
        %v1254 = vrot.slane %v1253, 4
        %v1255 = vmax.f32 %v1253, %v1254
        %v1256 = vrot.slane %v1255, 2
        %v1257 = vmax.f32 %v1255, %v1256
        %v1258 = vrot.slane %v1257, 1
        %v1259 = vmax.f32 %v1257, %v1258
        %v1260 = vmax.f32 %v1250, %v1252
        %v1261 = vrot.slane %v1260, 4
        %v1262 = vmax.f32 %v1260, %v1261
        %v1263 = vrot.slane %v1262, 2
        %v1264 = vmax.f32 %v1262, %v1263
        %v1265 = vrot.slane %v1264, 1
        %v1266 = vmax.f32 %v1264, %v1265
        %v1267 = vsub.f32 %v1249, %v1259
        %v1268 = vsub.f32 %v1250, %v1266
        %v1269 = vsub.f32 %v1251, %v1259
        %v1270 = vsub.f32 %v1252, %v1266
        %v1271 = vmul.f32 %v1267, 1.442695
        %v1272 = vpow.pop %v1271
        %v1273 = vmul.f32 %v1268, 1.442695
        %v1274 = vpow.pop %v1273
        %v1275 = vmul.f32 %v1269, 1.442695
        %v1276 = vpow.pop %v1275
        %v1277 = vmul.f32 %v1270, 1.442695
        %v1278 = vpow.pop %v1277
        %v1279 = vadd.f32 %v1272, %v1276
        %v1280 = vrot.slane %v1279, 4
        %v1281 = vadd.f32 %v1279, %v1280
        %v1282 = vrot.slane %v1281, 2
        %v1283 = vadd.f32 %v1281, %v1282
        %v1284 = vrot.slane %v1283, 1
        %v1285 = vadd.f32 %v1283, %v1284
        %v1286 = vadd.f32 %v1274, %v1278
        %v1287 = vrot.slane %v1286, 4
        %v1288 = vadd.f32 %v1286, %v1287
        %v1289 = vrot.slane %v1288, 2
        %v1290 = vadd.f32 %v1288, %v1289
        %v1291 = vrot.slane %v1290, 1
        %v1292 = vadd.f32 %v1290, %v1291
        %v1293 = vrcp.pop %v1285
        %v1294 = vrcp.pop %v1292
        %v1295 = vmul.f32 %v294, %v1293
        %v1296 = vmul.f32 %v295, %v1294
        %v1297 = vlaneseq
        %v1298 = vshrl.u32 %v1297, 7
        %v1299 = vsub.s32 5, %v1298
        %v1300 = vrot.slane %v1295, %v1299
        %v1301 = vlaneseq
        %v1302 = vshrl.u32 %v1301, 7
        %v1303 = vsub.s32 5, %v1302
        %v1304 = vrot.slane %v1296, %v1303
        %v1305 = vmul.f32 %v1300, %v1272
        %v1306 = vmul.f32 %v1304, %v1274
        %v1307 = vmul.f32 %v1300, %v1276
        %v1308 = vmul.f32 %v1304, %v1278
        %v1309 = vadd.f32 %v1237, %v1305
        %v1310 = vadd.f32 %v1238, %v1306
        %v1311 = vadd.f32 %v1239, %v1307
        %v1312 = vadd.f32 %v1240, %v1308
        %v1313 = vlaneseq
        %v1314 = vshrl.u32 %v1313, 7
        %v1315 = vsub.s32 6, %v1314
        %v1316 = vrot.slane %v879, %v1315
        %v1317 = vlaneseq
        %v1318 = vshrl.u32 %v1317, 7
        %v1319 = vsub.s32 6, %v1318
        %v1320 = vrot.slane %v880, %v1319
        %v1321 = vmul.f32 %v1316, %v292
        %v1322 = vmul.f32 %v1320, %v293
        %v1323 = vmul.f32 %v1316, %v294
        %v1324 = vmul.f32 %v1320, %v295
        %v1325 = vmax.f32 %v1321, %v1323
        %v1326 = vrot.slane %v1325, 4
        %v1327 = vmax.f32 %v1325, %v1326
        %v1328 = vrot.slane %v1327, 2
        %v1329 = vmax.f32 %v1327, %v1328
        %v1330 = vrot.slane %v1329, 1
        %v1331 = vmax.f32 %v1329, %v1330
        %v1332 = vmax.f32 %v1322, %v1324
        %v1333 = vrot.slane %v1332, 4
        %v1334 = vmax.f32 %v1332, %v1333
        %v1335 = vrot.slane %v1334, 2
        %v1336 = vmax.f32 %v1334, %v1335
        %v1337 = vrot.slane %v1336, 1
        %v1338 = vmax.f32 %v1336, %v1337
        %v1339 = vsub.f32 %v1321, %v1331
        %v1340 = vsub.f32 %v1322, %v1338
        %v1341 = vsub.f32 %v1323, %v1331
        %v1342 = vsub.f32 %v1324, %v1338
        %v1343 = vmul.f32 %v1339, 1.442695
        %v1344 = vpow.pop %v1343
        %v1345 = vmul.f32 %v1340, 1.442695
        %v1346 = vpow.pop %v1345
        %v1347 = vmul.f32 %v1341, 1.442695
        %v1348 = vpow.pop %v1347
        %v1349 = vmul.f32 %v1342, 1.442695
        %v1350 = vpow.pop %v1349
        %v1351 = vadd.f32 %v1344, %v1348
        %v1352 = vrot.slane %v1351, 4
        %v1353 = vadd.f32 %v1351, %v1352
        %v1354 = vrot.slane %v1353, 2
        %v1355 = vadd.f32 %v1353, %v1354
        %v1356 = vrot.slane %v1355, 1
        %v1357 = vadd.f32 %v1355, %v1356
        %v1358 = vadd.f32 %v1346, %v1350
        %v1359 = vrot.slane %v1358, 4
        %v1360 = vadd.f32 %v1358, %v1359
        %v1361 = vrot.slane %v1360, 2
        %v1362 = vadd.f32 %v1360, %v1361
        %v1363 = vrot.slane %v1362, 1
        %v1364 = vadd.f32 %v1362, %v1363
        %v1365 = vrcp.pop %v1357
        %v1366 = vrcp.pop %v1364
        %v1367 = vmul.f32 %v294, %v1365
        %v1368 = vmul.f32 %v295, %v1366
        %v1369 = vlaneseq
        %v1370 = vshrl.u32 %v1369, 7
        %v1371 = vsub.s32 6, %v1370
        %v1372 = vrot.slane %v1367, %v1371
        %v1373 = vlaneseq
        %v1374 = vshrl.u32 %v1373, 7
        %v1375 = vsub.s32 6, %v1374
        %v1376 = vrot.slane %v1368, %v1375
        %v1377 = vmul.f32 %v1372, %v1344
        %v1378 = vmul.f32 %v1376, %v1346
        %v1379 = vmul.f32 %v1372, %v1348
        %v1380 = vmul.f32 %v1376, %v1350
        %v1381 = vadd.f32 %v1309, %v1377
        %v1382 = vadd.f32 %v1310, %v1378
        %v1383 = vadd.f32 %v1311, %v1379
        %v1384 = vadd.f32 %v1312, %v1380
        %v1385 = vlaneseq
        %v1386 = vshrl.u32 %v1385, 7
        %v1387 = vsub.s32 7, %v1386
        %v1388 = vrot.slane %v879, %v1387
        %v1389 = vlaneseq
        %v1390 = vshrl.u32 %v1389, 7
        %v1391 = vsub.s32 7, %v1390
        %v1392 = vrot.slane %v880, %v1391
        %v1393 = vmul.f32 %v1388, %v292
        %v1394 = vmul.f32 %v1392, %v293
        %v1395 = vmul.f32 %v1388, %v294
        %v1396 = vmul.f32 %v1392, %v295
        %v1397 = vmax.f32 %v1393, %v1395
        %v1398 = vrot.slane %v1397, 4
        %v1399 = vmax.f32 %v1397, %v1398
        %v1400 = vrot.slane %v1399, 2
        %v1401 = vmax.f32 %v1399, %v1400
        %v1402 = vrot.slane %v1401, 1
        %v1403 = vmax.f32 %v1401, %v1402
        %v1404 = vmax.f32 %v1394, %v1396
        %v1405 = vrot.slane %v1404, 4
        %v1406 = vmax.f32 %v1404, %v1405
        %v1407 = vrot.slane %v1406, 2
        %v1408 = vmax.f32 %v1406, %v1407
        %v1409 = vrot.slane %v1408, 1
        %v1410 = vmax.f32 %v1408, %v1409
        %v1411 = vsub.f32 %v1393, %v1403
        %v1412 = vsub.f32 %v1394, %v1410
        %v1413 = vsub.f32 %v1395, %v1403
        %v1414 = vsub.f32 %v1396, %v1410
        %v1415 = vmul.f32 %v1411, 1.442695
        %v1416 = vpow.pop %v1415
        %v1417 = vmul.f32 %v1412, 1.442695
        %v1418 = vpow.pop %v1417
        %v1419 = vmul.f32 %v1413, 1.442695
        %v1420 = vpow.pop %v1419
        %v1421 = vmul.f32 %v1414, 1.442695
        %v1422 = vpow.pop %v1421
        %v1423 = vadd.f32 %v1416, %v1420
        %v1424 = vrot.slane %v1423, 4
        %v1425 = vadd.f32 %v1423, %v1424
        %v1426 = vrot.slane %v1425, 2
        %v1427 = vadd.f32 %v1425, %v1426
        %v1428 = vrot.slane %v1427, 1
        %v1429 = vadd.f32 %v1427, %v1428
        %v1430 = vadd.f32 %v1418, %v1422
        %v1431 = vrot.slane %v1430, 4
        %v1432 = vadd.f32 %v1430, %v1431
        %v1433 = vrot.slane %v1432, 2
        %v1434 = vadd.f32 %v1432, %v1433
        %v1435 = vrot.slane %v1434, 1
        %v1436 = vadd.f32 %v1434, %v1435
        %v1437 = vrcp.pop %v1429
        %v1438 = vrcp.pop %v1436
        %v1439 = vmul.f32 %v294, %v1437
        %v1440 = vmul.f32 %v295, %v1438
        %v1441 = vlaneseq
        %v1442 = vshrl.u32 %v1441, 7
        %v1443 = vsub.s32 7, %v1442
        %v1444 = vrot.slane %v1439, %v1443
        %v1445 = vlaneseq
        %v1446 = vshrl.u32 %v1445, 7
        %v1447 = vsub.s32 7, %v1446
        %v1448 = vrot.slane %v1440, %v1447
        %v1449 = vmul.f32 %v1444, %v1416
        %v1450 = vmul.f32 %v1448, %v1418
        %v1451 = vmul.f32 %v1444, %v1420
        %v1452 = vmul.f32 %v1448, %v1422
        %v1453 = vadd.f32 %v1381, %v1449
        %v1454 = vadd.f32 %v1382, %v1450
        %v1455 = vadd.f32 %v1383, %v1451
        %v1456 = vadd.f32 %v1384, %v1452
        %v1457 = vstv %s297
        %v1458 = vmul.f32 %v1457, %v1453
        %v1459 = vmul.f32 %v1457, %v1454
        %v1460 = vmul.f32 %v1457, %v1455
        %v1461 = vmul.f32 %v1457, %v1456
        %v1462 = vld [vmem:[%s2] sm:$0xff]
        %v1463 = vld [vmem:[%s2 + $0x8] sm:$0xff]
        %v1464 = vld [vmem:[%s2 + $0x10] sm:$0xff]
        %v1465 = vld [vmem:[%s2 + $0x18] sm:$0xff]
        %v1466 = vld [vmem:[%s3] sm:$0xff]
        %v1467 = vld [vmem:[%s3 + $0x8] sm:$0xff]
        %v1468 = vld [vmem:[%s3 + $0x10] sm:$0xff]
        %v1469 = vld [vmem:[%s3 + $0x18] sm:$0xff]
        %1471 = vset.pattern.permute.xlu0 0
        %1472 = vperm.xlu0 %1471, %v1466
        %v1473 = vpop.permute.xlu0 %1472
        %1476 = vset.pattern.permute.xlu0 0
        %1477 = vperm.xlu0 %1476, %v1467
        %v1478 = vpop.permute.xlu0 %1477
        %1481 = vset.pattern.permute.xlu0 0
        %1482 = vperm.xlu0 %1481, %v1468
        %v1483 = vpop.permute.xlu0 %1482
        %1486 = vset.pattern.permute.xlu0 0
        %1487 = vperm.xlu0 %1486, %v1469
        %v1488 = vpop.permute.xlu0 %1487
        %vm1490 = vcmask 130048
        %v1492 = vsel %vm1490, %v1462, 0
        %v1495 = vsel %vm1490, %v1463, 0
        %v1498 = vsel %vm1490, %v1464, 0
        %v1501 = vsel %vm1490, %v1465, 0
        %1503 = vmatprep.subr.mxu0 0.0
        %1504 = vmatpush1.msra.mxu0 0.0
        %1505 = vmatprep.subr.mxu0 0.0
        %1506 = vmatpush1.msra.mxu0 0.0
        %1507 = vmatprep.subr.mxu0 0.0
        %1508 = vmatpush1.msra.mxu0 0.0
        %1509 = vmatprep.subr.mxu0 0.0
        %1510 = vmatpush1.msra.mxu0 0.0
        %1511 = vmatprep.subr.mxu0 0.0
        %1512 = vmatpush1.msra.mxu0 0.0
        %1513 = vmatprep.subr.mxu0 0.0
        %1514 = vmatpush1.msra.mxu0 0.0
        %1515 = vmatprep.subr.mxu0 0.0
        %1516 = vmatpush1.msra.mxu0 0.0
        %1517 = vmatprep.subr.mxu0 0.0
        %1518 = vmatpush1.msra.mxu0 0.0
        %1519 = vmatprep.subr.mxu0 0.0
        %1520 = vmatpush1.msra.mxu0 0.0
        %1521 = vmatprep.subr.mxu0 0.0
        %1522 = vmatpush1.msra.mxu0 0.0
        %1523 = vmatprep.subr.mxu0 0.0
        %1524 = vmatpush1.msra.mxu0 0.0
        %1525 = vmatprep.subr.mxu0 0.0
        %1526 = vmatpush1.msra.mxu0 0.0
        %1527 = vmatprep.subr.mxu0 0.0
        %1528 = vmatpush1.msra.mxu0 0.0
        %1529 = vmatprep.subr.mxu0 0.0
        %1530 = vmatpush1.msra.mxu0 0.0
        %1531 = vmatprep.subr.mxu0 %v1461
        %1532 = vmatpush1.msra.mxu0 %v1460
        %1533 = vmatprep.subr.mxu0 %v1459
        %1534 = vmatpush1.msra.mxu0 %v1458
        %1535 = vmatprep.subr.mxu0 0.0
        %1536 = vmatpush2.msra.mxu0 0.0
        %1537 = vmatprep.subr.mxu0 0.0
        %1538 = vmatpush2.msra.mxu0 0.0
        %1539 = vmatprep.subr.mxu0 0.0
        %1540 = vmatpush2.msra.mxu0 0.0
        %1541 = vmatprep.subr.mxu0 0.0
        %1542 = vmatpush2.msra.mxu0 0.0
        %1543 = vmatprep.subr.mxu0 0.0
        %1544 = vmatpush2.msra.mxu0 0.0
        %1545 = vmatprep.subr.mxu0 0.0
        %1546 = vmatpush2.msra.mxu0 0.0
        %1547 = vmatprep.subr.mxu0 0.0
        %1548 = vmatpush2.msra.mxu0 0.0
        %1549 = vmatprep.subr.mxu0 0.0
        %1550 = vmatpush2.msra.mxu0 0.0
        %1551 = vmatprep.subr.mxu0 0.0
        %1552 = vmatpush2.msra.mxu0 0.0
        %1553 = vmatprep.subr.mxu0 0.0
        %1554 = vmatpush2.msra.mxu0 0.0
        %1555 = vmatprep.subr.mxu0 0.0
        %1556 = vmatpush2.msra.mxu0 0.0
        %1557 = vmatprep.subr.mxu0 0.0
        %1558 = vmatpush2.msra.mxu0 0.0
        %1559 = vmatprep.subr.mxu0 0.0
        %1560 = vmatpush2.msra.mxu0 0.0
        %1561 = vmatprep.subr.mxu0 0.0
        %1562 = vmatpush2.msra.mxu0 0.0
        %1563 = vmatprep.subr.mxu0 0.0
        %1564 = vmatpush2.msra.mxu0 0.0
        %1565 = vmatprep.subr.mxu0 0.0
        %1566 = vmatpush2.msra.mxu0 0.0
        %1567 = vmatprep.mubr.f32.mxu0 0.0
        %1568 = vmatmul.mubr.f32.gmra.mxu0 %v1492
        %v1569 = vpop.f32.mrf.mxu0
        %v1570 = vadd.f32 %v1473, %v1569
        %v1571 = vpop.f32.mrf.mxu0
        %v1572 = vadd.f32 %v1473, %v1571
        %1573 = vmatprep.mubr.f32.mxu0 0.0
        %1574 = vmatmul.mubr.f32.gmra.mxu0 %v1495
        %v1575 = vpop.f32.mrf.mxu0
        %v1576 = vadd.f32 %v1478, %v1575
        %v1577 = vpop.f32.mrf.mxu0
        %v1578 = vadd.f32 %v1478, %v1577
        %1579 = vmatprep.mubr.f32.mxu0 0.0
        %1580 = vmatmul.mubr.f32.gmra.mxu0 %v1498
        %v1581 = vpop.f32.mrf.mxu0
        %v1582 = vadd.f32 %v1483, %v1581
        %v1583 = vpop.f32.mrf.mxu0
        %v1584 = vadd.f32 %v1483, %v1583
        %1585 = vmatprep.mubr.f32.mxu0 0.0
        %1586 = vmatmul.mubr.f32.gmra.mxu0 %v1501
        %v1587 = vpop.f32.mrf.mxu0
        %v1588 = vadd.f32 %v1488, %v1587
        %v1589 = vpop.f32.mrf.mxu0
        %v1590 = vadd.f32 %v1488, %v1589
        %1591 = vdwg.mxu0
        %v1592 = vxor.u32 %v1570, 2147483648
        %v1593 = vxor.u32 %v1572, 2147483648
        %v1594 = vxor.u32 %v1576, 2147483648
        %v1595 = vxor.u32 %v1578, 2147483648
        %v1596 = vxor.u32 %v1582, 2147483648
        %v1597 = vxor.u32 %v1584, 2147483648
        %v1598 = vxor.u32 %v1588, 2147483648
        %v1599 = vxor.u32 %v1590, 2147483648
        %v1600 = vmul.f32 %v1592, 1.442695
        %v1601 = vpow.pop %v1600
        %v1602 = vmul.f32 %v1593, 1.442695
        %v1603 = vpow.pop %v1602
        %v1604 = vmul.f32 %v1594, 1.442695
        %v1605 = vpow.pop %v1604
        %v1606 = vmul.f32 %v1595, 1.442695
        %v1607 = vpow.pop %v1606
        %v1608 = vmul.f32 %v1596, 1.442695
        %v1609 = vpow.pop %v1608
        %v1610 = vmul.f32 %v1597, 1.442695
        %v1611 = vpow.pop %v1610
        %v1612 = vmul.f32 %v1598, 1.442695
        %v1613 = vpow.pop %v1612
        %v1614 = vmul.f32 %v1599, 1.442695
        %v1615 = vpow.pop %v1614
        %v1616 = vadd.f32 %v1601, 1.0
        %v1617 = vadd.f32 %v1603, 1.0
        %v1618 = vadd.f32 %v1605, 1.0
        %v1619 = vadd.f32 %v1607, 1.0
        %v1620 = vadd.f32 %v1609, 1.0
        %v1621 = vadd.f32 %v1611, 1.0
        %v1622 = vadd.f32 %v1613, 1.0
        %v1623 = vadd.f32 %v1615, 1.0
        %v1624 = vrcp.pop %v1616
        %v1625 = vmul.f32 1.0, %v1624
        %v1626 = vrcp.pop %v1617
        %v1627 = vmul.f32 1.0, %v1626
        %v1628 = vrcp.pop %v1618
        %v1629 = vmul.f32 1.0, %v1628
        %v1630 = vrcp.pop %v1619
        %v1631 = vmul.f32 1.0, %v1630
        %v1632 = vrcp.pop %v1620
        %v1633 = vmul.f32 1.0, %v1632
        %v1634 = vrcp.pop %v1621
        %v1635 = vmul.f32 1.0, %v1634
        %v1636 = vrcp.pop %v1622
        %v1637 = vmul.f32 1.0, %v1636
        %v1638 = vrcp.pop %v1623
        %v1639 = vmul.f32 1.0, %v1638
        %v1640 = vld [vmem:[%s4] sm:$0xff]
        %v1641 = vld [vmem:[%s5] sm:$0xff]
        %1643 = vset.pattern.permute.xlu0 0
        %1644 = vperm.xlu0 %1643, %v1641
        %v1645 = vpop.permute.xlu0 %1644
        %vm1647 = vcmask 261120
        %v1649 = vsel %vm1647, %v1640, 0
        %1651 = vmatprep.subr.mxu0 0.0
        %1652 = vmatpush1.msra.mxu0 0.0
        %1653 = vmatprep.subr.mxu0 0.0
        %1654 = vmatpush1.msra.mxu0 0.0
        %1655 = vmatprep.subr.mxu0 0.0
        %1656 = vmatpush1.msra.mxu0 0.0
        %1657 = vmatprep.subr.mxu0 0.0
        %1658 = vmatpush1.msra.mxu0 0.0
        %1659 = vmatprep.subr.mxu0 0.0
        %1660 = vmatpush1.msra.mxu0 0.0
        %1661 = vmatprep.subr.mxu0 0.0
        %1662 = vmatpush1.msra.mxu0 0.0
        %1663 = vmatprep.subr.mxu0 0.0
        %1664 = vmatpush1.msra.mxu0 0.0
        %1665 = vmatprep.subr.mxu0 0.0
        %1666 = vmatpush1.msra.mxu0 0.0
        %1667 = vmatprep.subr.mxu0 0.0
        %1668 = vmatpush1.msra.mxu0 0.0
        %1669 = vmatprep.subr.mxu0 0.0
        %1670 = vmatpush1.msra.mxu0 0.0
        %1671 = vmatprep.subr.mxu0 0.0
        %1672 = vmatpush1.msra.mxu0 0.0
        %1673 = vmatprep.subr.mxu0 0.0
        %1674 = vmatpush1.msra.mxu0 0.0
        %1675 = vmatprep.subr.mxu0 %v1639
        %1676 = vmatpush1.msra.mxu0 %v1637
        %1677 = vmatprep.subr.mxu0 %v1635
        %1678 = vmatpush1.msra.mxu0 %v1633
        %1679 = vmatprep.subr.mxu0 %v1631
        %1680 = vmatpush1.msra.mxu0 %v1629
        %1681 = vmatprep.subr.mxu0 %v1627
        %1682 = vmatpush1.msra.mxu0 %v1625
        %1683 = vmatprep.subr.mxu0 0.0
        %1684 = vmatpush2.msra.mxu0 0.0
        %1685 = vmatprep.subr.mxu0 0.0
        %1686 = vmatpush2.msra.mxu0 0.0
        %1687 = vmatprep.subr.mxu0 0.0
        %1688 = vmatpush2.msra.mxu0 0.0
        %1689 = vmatprep.subr.mxu0 0.0
        %1690 = vmatpush2.msra.mxu0 0.0
        %1691 = vmatprep.subr.mxu0 0.0
        %1692 = vmatpush2.msra.mxu0 0.0
        %1693 = vmatprep.subr.mxu0 0.0
        %1694 = vmatpush2.msra.mxu0 0.0
        %1695 = vmatprep.subr.mxu0 0.0
        %1696 = vmatpush2.msra.mxu0 0.0
        %1697 = vmatprep.subr.mxu0 0.0
        %1698 = vmatpush2.msra.mxu0 0.0
        %1699 = vmatprep.subr.mxu0 0.0
        %1700 = vmatpush2.msra.mxu0 0.0
        %1701 = vmatprep.subr.mxu0 0.0
        %1702 = vmatpush2.msra.mxu0 0.0
        %1703 = vmatprep.subr.mxu0 0.0
        %1704 = vmatpush2.msra.mxu0 0.0
        %1705 = vmatprep.subr.mxu0 0.0
        %1706 = vmatpush2.msra.mxu0 0.0
        %1707 = vmatprep.subr.mxu0 0.0
        %1708 = vmatpush2.msra.mxu0 0.0
        %1709 = vmatprep.subr.mxu0 0.0
        %1710 = vmatpush2.msra.mxu0 0.0
        %1711 = vmatprep.subr.mxu0 0.0
        %1712 = vmatpush2.msra.mxu0 0.0
        %1713 = vmatprep.subr.mxu0 0.0
        %1714 = vmatpush2.msra.mxu0 0.0
        %1715 = vmatprep.mubr.f32.mxu0 0.0
        %1716 = vmatmul.mubr.f32.gmra.mxu0 %v1649
        %v1717 = vpop.f32.mrf.mxu0
        %v1718 = vadd.f32 %v1645, %v1717
        %v1719 = vpop.f32.mrf.mxu0
        %v1720 = vadd.f32 %v1645, %v1719
        %1721 = vdwg.mxu0
        %v1722 = vstv %s298
        %v1723 = vmul.f32 %v1722, %v1718
        %v1724 = vmul.f32 %v1722, %v1720
        %v1725 = vlaneseq
        %v1726 = vshrl.u32 %v1725, 7
        %v1727 = vsub.s32 0, %v1726
        %v1728 = vrot.slane %v1723, %v1727
        %v1729 = vlaneseq
        %v1730 = vshrl.u32 %v1729, 7
        %v1731 = vsub.s32 0, %v1730
        %v1732 = vrot.slane %v1724, %v1731
        %v1733 = vmul.f32 %v1728, %v1718
        %v1734 = vmul.f32 %v1732, %v1720
        %v1735 = vrot.slane %v1733, 4
        %v1736 = vmax.f32 %v1733, %v1735
        %v1737 = vrot.slane %v1736, 2
        %v1738 = vmax.f32 %v1736, %v1737
        %v1739 = vrot.slane %v1738, 1
        %v1740 = vmax.f32 %v1738, %v1739
        %v1741 = vrot.slane %v1734, 4
        %v1742 = vmax.f32 %v1734, %v1741
        %v1743 = vrot.slane %v1742, 2
        %v1744 = vmax.f32 %v1742, %v1743
        %v1745 = vrot.slane %v1744, 1
        %v1746 = vmax.f32 %v1744, %v1745
        %v1747 = vsub.f32 %v1733, %v1740
        %v1748 = vsub.f32 %v1734, %v1746
        %v1749 = vmul.f32 %v1747, 1.442695
        %v1750 = vpow.pop %v1749
        %v1751 = vmul.f32 %v1748, 1.442695
        %v1752 = vpow.pop %v1751
        %v1753 = vrot.slane %v1750, 4
        %v1754 = vadd.f32 %v1750, %v1753
        %v1755 = vrot.slane %v1754, 2
        %v1756 = vadd.f32 %v1754, %v1755
        %v1757 = vrot.slane %v1756, 1
        %v1758 = vadd.f32 %v1756, %v1757
        %v1759 = vrot.slane %v1752, 4
        %v1760 = vadd.f32 %v1752, %v1759
        %v1761 = vrot.slane %v1760, 2
        %v1762 = vadd.f32 %v1760, %v1761
        %v1763 = vrot.slane %v1762, 1
        %v1764 = vadd.f32 %v1762, %v1763
        %v1765 = vrcp.pop %v1758
        %v1766 = vrcp.pop %v1764
        %v1767 = vmul.f32 %v1718, %v1765
        %v1768 = vmul.f32 %v1720, %v1766
        %v1769 = vlaneseq
        %v1770 = vshrl.u32 %v1769, 7
        %v1771 = vsub.s32 0, %v1770
        %v1772 = vrot.slane %v1767, %v1771
        %v1773 = vlaneseq
        %v1774 = vshrl.u32 %v1773, 7
        %v1775 = vsub.s32 0, %v1774
        %v1776 = vrot.slane %v1768, %v1775
        %v1777 = vmul.f32 %v1772, %v1750
        %v1778 = vmul.f32 %v1776, %v1752
        %v1779 = vadd.f32 %v1777, 0.0
        %v1780 = vadd.f32 %v1778, 0.0
        %v1781 = vlaneseq
        %v1782 = vshrl.u32 %v1781, 7
        %v1783 = vsub.s32 1, %v1782
        %v1784 = vrot.slane %v1723, %v1783
        %v1785 = vlaneseq
        %v1786 = vshrl.u32 %v1785, 7
        %v1787 = vsub.s32 1, %v1786
        %v1788 = vrot.slane %v1724, %v1787
        %v1789 = vmul.f32 %v1784, %v1718
        %v1790 = vmul.f32 %v1788, %v1720
        %v1791 = vrot.slane %v1789, 4
        %v1792 = vmax.f32 %v1789, %v1791
        %v1793 = vrot.slane %v1792, 2
        %v1794 = vmax.f32 %v1792, %v1793
        %v1795 = vrot.slane %v1794, 1
        %v1796 = vmax.f32 %v1794, %v1795
        %v1797 = vrot.slane %v1790, 4
        %v1798 = vmax.f32 %v1790, %v1797
        %v1799 = vrot.slane %v1798, 2
        %v1800 = vmax.f32 %v1798, %v1799
        %v1801 = vrot.slane %v1800, 1
        %v1802 = vmax.f32 %v1800, %v1801
        %v1803 = vsub.f32 %v1789, %v1796
        %v1804 = vsub.f32 %v1790, %v1802
        %v1805 = vmul.f32 %v1803, 1.442695
        %v1806 = vpow.pop %v1805
        %v1807 = vmul.f32 %v1804, 1.442695
        %v1808 = vpow.pop %v1807
        %v1809 = vrot.slane %v1806, 4
        %v1810 = vadd.f32 %v1806, %v1809
        %v1811 = vrot.slane %v1810, 2
        %v1812 = vadd.f32 %v1810, %v1811
        %v1813 = vrot.slane %v1812, 1
        %v1814 = vadd.f32 %v1812, %v1813
        %v1815 = vrot.slane %v1808, 4
        %v1816 = vadd.f32 %v1808, %v1815
        %v1817 = vrot.slane %v1816, 2
        %v1818 = vadd.f32 %v1816, %v1817
        %v1819 = vrot.slane %v1818, 1
        %v1820 = vadd.f32 %v1818, %v1819
        %v1821 = vrcp.pop %v1814
        %v1822 = vrcp.pop %v1820
        %v1823 = vmul.f32 %v1718, %v1821
        %v1824 = vmul.f32 %v1720, %v1822
        %v1825 = vlaneseq
        %v1826 = vshrl.u32 %v1825, 7
        %v1827 = vsub.s32 1, %v1826
        %v1828 = vrot.slane %v1823, %v1827
        %v1829 = vlaneseq
        %v1830 = vshrl.u32 %v1829, 7
        %v1831 = vsub.s32 1, %v1830
        %v1832 = vrot.slane %v1824, %v1831
        %v1833 = vmul.f32 %v1828, %v1806
        %v1834 = vmul.f32 %v1832, %v1808
        %v1835 = vadd.f32 %v1779, %v1833
        %v1836 = vadd.f32 %v1780, %v1834
        %v1837 = vlaneseq
        %v1838 = vshrl.u32 %v1837, 7
        %v1839 = vsub.s32 2, %v1838
        %v1840 = vrot.slane %v1723, %v1839
        %v1841 = vlaneseq
        %v1842 = vshrl.u32 %v1841, 7
        %v1843 = vsub.s32 2, %v1842
        %v1844 = vrot.slane %v1724, %v1843
        %v1845 = vmul.f32 %v1840, %v1718
        %v1846 = vmul.f32 %v1844, %v1720
        %v1847 = vrot.slane %v1845, 4
        %v1848 = vmax.f32 %v1845, %v1847
        %v1849 = vrot.slane %v1848, 2
        %v1850 = vmax.f32 %v1848, %v1849
        %v1851 = vrot.slane %v1850, 1
        %v1852 = vmax.f32 %v1850, %v1851
        %v1853 = vrot.slane %v1846, 4
        %v1854 = vmax.f32 %v1846, %v1853
        %v1855 = vrot.slane %v1854, 2
        %v1856 = vmax.f32 %v1854, %v1855
        %v1857 = vrot.slane %v1856, 1
        %v1858 = vmax.f32 %v1856, %v1857
        %v1859 = vsub.f32 %v1845, %v1852
        %v1860 = vsub.f32 %v1846, %v1858
        %v1861 = vmul.f32 %v1859, 1.442695
        %v1862 = vpow.pop %v1861
        %v1863 = vmul.f32 %v1860, 1.442695
        %v1864 = vpow.pop %v1863
        %v1865 = vrot.slane %v1862, 4
        %v1866 = vadd.f32 %v1862, %v1865
        %v1867 = vrot.slane %v1866, 2
        %v1868 = vadd.f32 %v1866, %v1867
        %v1869 = vrot.slane %v1868, 1
        %v1870 = vadd.f32 %v1868, %v1869
        %v1871 = vrot.slane %v1864, 4
        %v1872 = vadd.f32 %v1864, %v1871
        %v1873 = vrot.slane %v1872, 2
        %v1874 = vadd.f32 %v1872, %v1873
        %v1875 = vrot.slane %v1874, 1
        %v1876 = vadd.f32 %v1874, %v1875
        %v1877 = vrcp.pop %v1870
        %v1878 = vrcp.pop %v1876
        %v1879 = vmul.f32 %v1718, %v1877
        %v1880 = vmul.f32 %v1720, %v1878
        %v1881 = vlaneseq
        %v1882 = vshrl.u32 %v1881, 7
        %v1883 = vsub.s32 2, %v1882
        %v1884 = vrot.slane %v1879, %v1883
        %v1885 = vlaneseq
        %v1886 = vshrl.u32 %v1885, 7
        %v1887 = vsub.s32 2, %v1886
        %v1888 = vrot.slane %v1880, %v1887
        %v1889 = vmul.f32 %v1884, %v1862
        %v1890 = vmul.f32 %v1888, %v1864
        %v1891 = vadd.f32 %v1835, %v1889
        %v1892 = vadd.f32 %v1836, %v1890
        %v1893 = vlaneseq
        %v1894 = vshrl.u32 %v1893, 7
        %v1895 = vsub.s32 3, %v1894
        %v1896 = vrot.slane %v1723, %v1895
        %v1897 = vlaneseq
        %v1898 = vshrl.u32 %v1897, 7
        %v1899 = vsub.s32 3, %v1898
        %v1900 = vrot.slane %v1724, %v1899
        %v1901 = vmul.f32 %v1896, %v1718
        %v1902 = vmul.f32 %v1900, %v1720
        %v1903 = vrot.slane %v1901, 4
        %v1904 = vmax.f32 %v1901, %v1903
        %v1905 = vrot.slane %v1904, 2
        %v1906 = vmax.f32 %v1904, %v1905
        %v1907 = vrot.slane %v1906, 1
        %v1908 = vmax.f32 %v1906, %v1907
        %v1909 = vrot.slane %v1902, 4
        %v1910 = vmax.f32 %v1902, %v1909
        %v1911 = vrot.slane %v1910, 2
        %v1912 = vmax.f32 %v1910, %v1911
        %v1913 = vrot.slane %v1912, 1
        %v1914 = vmax.f32 %v1912, %v1913
        %v1915 = vsub.f32 %v1901, %v1908
        %v1916 = vsub.f32 %v1902, %v1914
        %v1917 = vmul.f32 %v1915, 1.442695
        %v1918 = vpow.pop %v1917
        %v1919 = vmul.f32 %v1916, 1.442695
        %v1920 = vpow.pop %v1919
        %v1921 = vrot.slane %v1918, 4
        %v1922 = vadd.f32 %v1918, %v1921
        %v1923 = vrot.slane %v1922, 2
        %v1924 = vadd.f32 %v1922, %v1923
        %v1925 = vrot.slane %v1924, 1
        %v1926 = vadd.f32 %v1924, %v1925
        %v1927 = vrot.slane %v1920, 4
        %v1928 = vadd.f32 %v1920, %v1927
        %v1929 = vrot.slane %v1928, 2
        %v1930 = vadd.f32 %v1928, %v1929
        %v1931 = vrot.slane %v1930, 1
        %v1932 = vadd.f32 %v1930, %v1931
        %v1933 = vrcp.pop %v1926
        %v1934 = vrcp.pop %v1932
        %v1935 = vmul.f32 %v1718, %v1933
        %v1936 = vmul.f32 %v1720, %v1934
        %v1937 = vlaneseq
        %v1938 = vshrl.u32 %v1937, 7
        %v1939 = vsub.s32 3, %v1938
        %v1940 = vrot.slane %v1935, %v1939
        %v1941 = vlaneseq
        %v1942 = vshrl.u32 %v1941, 7
        %v1943 = vsub.s32 3, %v1942
        %v1944 = vrot.slane %v1936, %v1943
        %v1945 = vmul.f32 %v1940, %v1918
        %v1946 = vmul.f32 %v1944, %v1920
        %v1947 = vadd.f32 %v1891, %v1945
        %v1948 = vadd.f32 %v1892, %v1946
        %v1949 = vlaneseq
        %v1950 = vshrl.u32 %v1949, 7
        %v1951 = vsub.s32 4, %v1950
        %v1952 = vrot.slane %v1723, %v1951
        %v1953 = vlaneseq
        %v1954 = vshrl.u32 %v1953, 7
        %v1955 = vsub.s32 4, %v1954
        %v1956 = vrot.slane %v1724, %v1955
        %v1957 = vmul.f32 %v1952, %v1718
        %v1958 = vmul.f32 %v1956, %v1720
        %v1959 = vrot.slane %v1957, 4
        %v1960 = vmax.f32 %v1957, %v1959
        %v1961 = vrot.slane %v1960, 2
        %v1962 = vmax.f32 %v1960, %v1961
        %v1963 = vrot.slane %v1962, 1
        %v1964 = vmax.f32 %v1962, %v1963
        %v1965 = vrot.slane %v1958, 4
        %v1966 = vmax.f32 %v1958, %v1965
        %v1967 = vrot.slane %v1966, 2
        %v1968 = vmax.f32 %v1966, %v1967
        %v1969 = vrot.slane %v1968, 1
        %v1970 = vmax.f32 %v1968, %v1969
        %v1971 = vsub.f32 %v1957, %v1964
        %v1972 = vsub.f32 %v1958, %v1970
        %v1973 = vmul.f32 %v1971, 1.442695
        %v1974 = vpow.pop %v1973
        %v1975 = vmul.f32 %v1972, 1.442695
        %v1976 = vpow.pop %v1975
        %v1977 = vrot.slane %v1974, 4
        %v1978 = vadd.f32 %v1974, %v1977
        %v1979 = vrot.slane %v1978, 2
        %v1980 = vadd.f32 %v1978, %v1979
        %v1981 = vrot.slane %v1980, 1
        %v1982 = vadd.f32 %v1980, %v1981
        %v1983 = vrot.slane %v1976, 4
        %v1984 = vadd.f32 %v1976, %v1983
        %v1985 = vrot.slane %v1984, 2
        %v1986 = vadd.f32 %v1984, %v1985
        %v1987 = vrot.slane %v1986, 1
        %v1988 = vadd.f32 %v1986, %v1987
        %v1989 = vrcp.pop %v1982
        %v1990 = vrcp.pop %v1988
        %v1991 = vmul.f32 %v1718, %v1989
        %v1992 = vmul.f32 %v1720, %v1990
        %v1993 = vlaneseq
        %v1994 = vshrl.u32 %v1993, 7
        %v1995 = vsub.s32 4, %v1994
        %v1996 = vrot.slane %v1991, %v1995
        %v1997 = vlaneseq
        %v1998 = vshrl.u32 %v1997, 7
        %v1999 = vsub.s32 4, %v1998
        %v2000 = vrot.slane %v1992, %v1999
        %v2001 = vmul.f32 %v1996, %v1974
        %v2002 = vmul.f32 %v2000, %v1976
        %v2003 = vadd.f32 %v1947, %v2001
        %v2004 = vadd.f32 %v1948, %v2002
        %v2005 = vlaneseq
        %v2006 = vshrl.u32 %v2005, 7
        %v2007 = vsub.s32 5, %v2006
        %v2008 = vrot.slane %v1723, %v2007
        %v2009 = vlaneseq
        %v2010 = vshrl.u32 %v2009, 7
        %v2011 = vsub.s32 5, %v2010
        %v2012 = vrot.slane %v1724, %v2011
        %v2013 = vmul.f32 %v2008, %v1718
        %v2014 = vmul.f32 %v2012, %v1720
        %v2015 = vrot.slane %v2013, 4
        %v2016 = vmax.f32 %v2013, %v2015
        %v2017 = vrot.slane %v2016, 2
        %v2018 = vmax.f32 %v2016, %v2017
        %v2019 = vrot.slane %v2018, 1
        %v2020 = vmax.f32 %v2018, %v2019
        %v2021 = vrot.slane %v2014, 4
        %v2022 = vmax.f32 %v2014, %v2021
        %v2023 = vrot.slane %v2022, 2
        %v2024 = vmax.f32 %v2022, %v2023
        %v2025 = vrot.slane %v2024, 1
        %v2026 = vmax.f32 %v2024, %v2025
        %v2027 = vsub.f32 %v2013, %v2020
        %v2028 = vsub.f32 %v2014, %v2026
        %v2029 = vmul.f32 %v2027, 1.442695
        %v2030 = vpow.pop %v2029
        %v2031 = vmul.f32 %v2028, 1.442695
        %v2032 = vpow.pop %v2031
        %v2033 = vrot.slane %v2030, 4
        %v2034 = vadd.f32 %v2030, %v2033
        %v2035 = vrot.slane %v2034, 2
        %v2036 = vadd.f32 %v2034, %v2035
        %v2037 = vrot.slane %v2036, 1
        %v2038 = vadd.f32 %v2036, %v2037
        %v2039 = vrot.slane %v2032, 4
        %v2040 = vadd.f32 %v2032, %v2039
        %v2041 = vrot.slane %v2040, 2
        %v2042 = vadd.f32 %v2040, %v2041
        %v2043 = vrot.slane %v2042, 1
        %v2044 = vadd.f32 %v2042, %v2043
        %v2045 = vrcp.pop %v2038
        %v2046 = vrcp.pop %v2044
        %v2047 = vmul.f32 %v1718, %v2045
        %v2048 = vmul.f32 %v1720, %v2046
        %v2049 = vlaneseq
        %v2050 = vshrl.u32 %v2049, 7
        %v2051 = vsub.s32 5, %v2050
        %v2052 = vrot.slane %v2047, %v2051
        %v2053 = vlaneseq
        %v2054 = vshrl.u32 %v2053, 7
        %v2055 = vsub.s32 5, %v2054
        %v2056 = vrot.slane %v2048, %v2055
        %v2057 = vmul.f32 %v2052, %v2030
        %v2058 = vmul.f32 %v2056, %v2032
        %v2059 = vadd.f32 %v2003, %v2057
        %v2060 = vadd.f32 %v2004, %v2058
        %v2061 = vlaneseq
        %v2062 = vshrl.u32 %v2061, 7
        %v2063 = vsub.s32 6, %v2062
        %v2064 = vrot.slane %v1723, %v2063
        %v2065 = vlaneseq
        %v2066 = vshrl.u32 %v2065, 7
        %v2067 = vsub.s32 6, %v2066
        %v2068 = vrot.slane %v1724, %v2067
        %v2069 = vmul.f32 %v2064, %v1718
        %v2070 = vmul.f32 %v2068, %v1720
        %v2071 = vrot.slane %v2069, 4
        %v2072 = vmax.f32 %v2069, %v2071
        %v2073 = vrot.slane %v2072, 2
        %v2074 = vmax.f32 %v2072, %v2073
        %v2075 = vrot.slane %v2074, 1
        %v2076 = vmax.f32 %v2074, %v2075
        %v2077 = vrot.slane %v2070, 4
        %v2078 = vmax.f32 %v2070, %v2077
        %v2079 = vrot.slane %v2078, 2
        %v2080 = vmax.f32 %v2078, %v2079
        %v2081 = vrot.slane %v2080, 1
        %v2082 = vmax.f32 %v2080, %v2081
        %v2083 = vsub.f32 %v2069, %v2076
        %v2084 = vsub.f32 %v2070, %v2082
        %v2085 = vmul.f32 %v2083, 1.442695
        %v2086 = vpow.pop %v2085
        %v2087 = vmul.f32 %v2084, 1.442695
        %v2088 = vpow.pop %v2087
        %v2089 = vrot.slane %v2086, 4
        %v2090 = vadd.f32 %v2086, %v2089
        %v2091 = vrot.slane %v2090, 2
        %v2092 = vadd.f32 %v2090, %v2091
        %v2093 = vrot.slane %v2092, 1
        %v2094 = vadd.f32 %v2092, %v2093
        %v2095 = vrot.slane %v2088, 4
        %v2096 = vadd.f32 %v2088, %v2095
        %v2097 = vrot.slane %v2096, 2
        %v2098 = vadd.f32 %v2096, %v2097
        %v2099 = vrot.slane %v2098, 1
        %v2100 = vadd.f32 %v2098, %v2099
        %v2101 = vrcp.pop %v2094
        %v2102 = vrcp.pop %v2100
        %v2103 = vmul.f32 %v1718, %v2101
        %v2104 = vmul.f32 %v1720, %v2102
        %v2105 = vlaneseq
        %v2106 = vshrl.u32 %v2105, 7
        %v2107 = vsub.s32 6, %v2106
        %v2108 = vrot.slane %v2103, %v2107
        %v2109 = vlaneseq
        %v2110 = vshrl.u32 %v2109, 7
        %v2111 = vsub.s32 6, %v2110
        %v2112 = vrot.slane %v2104, %v2111
        %v2113 = vmul.f32 %v2108, %v2086
        %v2114 = vmul.f32 %v2112, %v2088
        %v2115 = vadd.f32 %v2059, %v2113
        %v2116 = vadd.f32 %v2060, %v2114
        %v2117 = vlaneseq
        %v2118 = vshrl.u32 %v2117, 7
        %v2119 = vsub.s32 7, %v2118
        %v2120 = vrot.slane %v1723, %v2119
        %v2121 = vlaneseq
        %v2122 = vshrl.u32 %v2121, 7
        %v2123 = vsub.s32 7, %v2122
        %v2124 = vrot.slane %v1724, %v2123
        %v2125 = vmul.f32 %v2120, %v1718
        %v2126 = vmul.f32 %v2124, %v1720
        %v2127 = vrot.slane %v2125, 4
        %v2128 = vmax.f32 %v2125, %v2127
        %v2129 = vrot.slane %v2128, 2
        %v2130 = vmax.f32 %v2128, %v2129
        %v2131 = vrot.slane %v2130, 1
        %v2132 = vmax.f32 %v2130, %v2131
        %v2133 = vrot.slane %v2126, 4
        %v2134 = vmax.f32 %v2126, %v2133
        %v2135 = vrot.slane %v2134, 2
        %v2136 = vmax.f32 %v2134, %v2135
        %v2137 = vrot.slane %v2136, 1
        %v2138 = vmax.f32 %v2136, %v2137
        %v2139 = vsub.f32 %v2125, %v2132
        %v2140 = vsub.f32 %v2126, %v2138
        %v2141 = vmul.f32 %v2139, 1.442695
        %v2142 = vpow.pop %v2141
        %v2143 = vmul.f32 %v2140, 1.442695
        %v2144 = vpow.pop %v2143
        %v2145 = vrot.slane %v2142, 4
        %v2146 = vadd.f32 %v2142, %v2145
        %v2147 = vrot.slane %v2146, 2
        %v2148 = vadd.f32 %v2146, %v2147
        %v2149 = vrot.slane %v2148, 1
        %v2150 = vadd.f32 %v2148, %v2149
        %v2151 = vrot.slane %v2144, 4
        %v2152 = vadd.f32 %v2144, %v2151
        %v2153 = vrot.slane %v2152, 2
        %v2154 = vadd.f32 %v2152, %v2153
        %v2155 = vrot.slane %v2154, 1
        %v2156 = vadd.f32 %v2154, %v2155
        %v2157 = vrcp.pop %v2150
        %v2158 = vrcp.pop %v2156
        %v2159 = vmul.f32 %v1718, %v2157
        %v2160 = vmul.f32 %v1720, %v2158
        %v2161 = vlaneseq
        %v2162 = vshrl.u32 %v2161, 7
        %v2163 = vsub.s32 7, %v2162
        %v2164 = vrot.slane %v2159, %v2163
        %v2165 = vlaneseq
        %v2166 = vshrl.u32 %v2165, 7
        %v2167 = vsub.s32 7, %v2166
        %v2168 = vrot.slane %v2160, %v2167
        %v2169 = vmul.f32 %v2164, %v2142
        %v2170 = vmul.f32 %v2168, %v2144
        %v2171 = vadd.f32 %v2115, %v2169
        %v2172 = vadd.f32 %v2116, %v2170
        %v2173 = vstv %s299
        %v2174 = vmul.f32 %v2173, %v2171
        %v2175 = vmul.f32 %v2173, %v2172
        %v2176 = vrot.slane %v2174, 4
        %v2177 = vmax.f32 %v2174, %v2176
        %v2178 = vrot.slane %v2177, 2
        %v2179 = vmax.f32 %v2177, %v2178
        %v2180 = vrot.slane %v2179, 1
        %v2181 = vmax.f32 %v2179, %v2180
        %v2182 = vrot.slane %v2175, 4
        %v2183 = vmax.f32 %v2175, %v2182
        %v2184 = vrot.slane %v2183, 2
        %v2185 = vmax.f32 %v2183, %v2184
        %v2186 = vrot.slane %v2185, 1
        %v2187 = vmax.f32 %v2185, %v2186
        %v2188 = vsub.f32 %v2174, %v2181
        %v2189 = vsub.f32 %v2175, %v2187
        %v2190 = vmul.f32 %v2188, 1.442695
        %v2191 = vpow.pop %v2190
        %v2192 = vmul.f32 %v2189, 1.442695
        %v2193 = vpow.pop %v2192
        %v2194 = vrot.slane %v2191, 4
        %v2195 = vadd.f32 %v2191, %v2194
        %v2196 = vrot.slane %v2195, 2
        %v2197 = vadd.f32 %v2195, %v2196
        %v2198 = vrot.slane %v2197, 1
        %v2199 = vadd.f32 %v2197, %v2198
        %v2200 = vrot.slane %v2193, 4
        %v2201 = vadd.f32 %v2193, %v2200
        %v2202 = vrot.slane %v2201, 2
        %v2203 = vadd.f32 %v2201, %v2202
        %v2204 = vrot.slane %v2203, 1
        %v2205 = vadd.f32 %v2203, %v2204
        %v2206 = vrcp.pop %v2199
        %v2207 = vmul.f32 %v2191, %v2206
        %v2208 = vrcp.pop %v2205
        %v2209 = vmul.f32 %v2193, %v2208
        %v2210 = vmul.f32 %v294, %v2207
        %v2211 = vmul.f32 %v295, %v2209
        %v2212 = vrot.slane %v2210, 4
        %v2213 = vadd.f32 %v2210, %v2212
        %v2214 = vrot.slane %v2213, 2
        %v2215 = vadd.f32 %v2213, %v2214
        %v2216 = vrot.slane %v2215, 1
        %v2217 = vadd.f32 %v2215, %v2216
        %v2218 = vrot.slane %v2211, 4
        %v2219 = vadd.f32 %v2211, %v2218
        %v2220 = vrot.slane %v2219, 2
        %v2221 = vadd.f32 %v2219, %v2220
        %v2222 = vrot.slane %v2221, 1
        %v2223 = vadd.f32 %v2221, %v2222
        %v2226 = vcombine.low %v2217, %v2223
        %v2228 = vunpack.c.l.s4 1966171168
        %v2229 = vunpack.c.0.s8 %v2228
        %v2230 = vlaneseq
        %v2231 = vshrl.u32 %v2230, 7
        %v2232 = vsub.s32 %v2229, %v2231
        %v2233 = vrot.slane %v2226, %v2232
        %v2235 = vunpack.c.l.s4 1966171168
        %v2236 = vunpack.c.0.s8 %v2235
        %v2237 = vlaneseq
        %v2238 = vshrl.u32 %v2237, 7
        %v2239 = vsub.s32 %v2236, %v2238
        %v2240 = vrot.slane %v2233, %v2239
        %v2242 = vlaneseq
        %vm2243 = vcmp.ge.s32.totalorder %v2242, 0
        %vm2244 = vcmp.lt.s32.totalorder %v2242, 256
        %vm2245 = vmand %vm2243, %vm2244
        %2246 = vst.msk [vmem:[%s289] sm:$0x3] %vm2245, %v2240
        %s2247 = sand.u32 %s160, 1
        %s2248 = scalar_lea.sflag [#allocation3], %s2247
        %s2249 = sand.u32 %s160, 1
        %s2250 = smul.addr %s2249, 2
        %s2251 = scalar_lea.vmem [#allocation6], %s2250
        // Predicated region
        $region72: #{tpu_custom_call.1} parent=62 // pred_check
          %p2252 = pneg %p170
        $region73: #{tpu_custom_call.1} parent=62 // pred_check_branch
          %2254 = sbr.rel (%p2252) target = $region75
        $region74: #{tpu_custom_call.1} parent=62 // pred_region
          %s2255 = smul.u32 2, %s21
          %s2257 = ssub.s32 32, 32
          %2258 = vsyncadd %s2248, %s2257
          %s2259 = smul.addr %s2255, 16
          %s2260 = scalar_lea.hbm %s6, %s2259
          %s2262 = sshll.u32 %s2251, 4
          %s2263 = int_to_ptr.vmem [resolvable:$true] %s2262
          %2265 = dma.vmem_to_hbm [thread:$0]  %s2263, 32, %s2260, %s2248
        $region75: #{tpu_custom_call.1} parent=62 // pred_fallthru
          _
      $region63: #{tpu_custom_call.1} parent=5 // pred_fallthru
        _
      %p2266 = scmp.le.s32.totalorder 2, %s16
      // Predicated region
      $region76: #{tpu_custom_call.1} parent=5 // pred_check
        %p2267 = pneg %p2266
      $region77: #{tpu_custom_call.1} parent=5 // pred_check_branch
        %2269 = sbr.rel (%p2267) target = $region79
      $region78: #{tpu_custom_call.1} parent=5 // pred_region
        %s2270 = ssub.s32 %s16, 2
        // Predicated region
        $region80: #{tpu_custom_call.1} parent=78 // pred_check
          %p2271 = pneg %p176
        $region81: #{tpu_custom_call.1} parent=78 // pred_check_branch
          %2273 = sbr.rel (%p2271) target = $region83
        $region82: #{tpu_custom_call.1} parent=78 // pred_region
          %s2274 = sand.u32 %s161, 1
          %s2275 = scalar_lea.sflag [#allocation3], %s2274
          %s2276 = sand.u32 %s161, 1
          %s2277 = smul.addr %s2276, 2
          %s2278 = scalar_lea.vmem [#allocation6], %s2277
          %2279 = dma.done %s2275, 32
        $region83: #{tpu_custom_call.1} parent=78 // pred_fallthru
          _
      $region79: #{tpu_custom_call.1} parent=5 // pred_fallthru
        _
    $region6: #{tpu_custom_call.1} parent=1 // loop_footer
      %s20 = sadd.s32 1, %s16
    $region7: #{tpu_custom_call.1} parent=1 // loop_footer_branch
      %15 = sbr.rel target = $region3
    $region8: #{tpu_custom_call.1} parent=1 // loop_exit
      _
    %2280 = vsyncpa [#allocation3], 1
    %s2281 = scalar_lea.sflag [#allocation3], 1
    %2282 = vsyncpa %s2281, 1
    %2283 = vsyncpa [#allocation4], 1
    %s2284 = scalar_lea.sflag [#allocation4], 1
    %2285 = vsyncpa %s2284, 1

</llo_original>
